<compile_context>
chip_gen: v6e
topology: v6e:2x2x1
jax: 0.10.0
libtpu: 0.0.40
codegen_flags: <defaults>
</compile_context>

<pallas_src>
import functools
from collections import OrderedDict

import jax
import jax.numpy as jnp
from jax.experimental import pallas as pl
from jax.experimental.pallas import tpu as pltpu

# --------------------------- model dimensions --------------------------------

C_IN, C_BB1, C_FEAT, C_HEAD, NUM_CLASSES = 4, 16, 32, 16, 5


# ----------------------------- Pallas kernel ---------------------------------

def _conv3x3_cols(a, w_ref, b_ref, masks, w):
    """3x3 'same' conv on a (C, H*W) feature map as ONE im2col matmul.

    a     : (Cin, HW) f32 value, spatial flattened row-major on the lane axis.
    w_ref : (Cout, 9*Cin) f32 ref, K index = (3*i + j)*Cin + c.
    b_ref : (Cout, 1) f32 ref.
    masks : (9, HW) f32 value; masks[t, p] == 1 iff the tap-t neighbour of p is in-bounds.
    Returns (Cout, HW) f32 pre-activation (conv + bias).
    """
    c, hw = a.shape
    pad = w + 1                                        # covers every |offset| <= W + 1
    zp = jnp.zeros((c, pad), a.dtype)
    ap = jnp.concatenate([zp, a, zp], axis=1)          # (C, HW + 2*(W+1))
    taps = []
    for i in range(3):
        for j in range(3):
            off = (i - 1) * w + (j - 1)
            s = ap[:, pad + off:pad + off + hw]        # shifted copy, zeros off the ends
            if off != 0:                               # centre tap's mask is all-ones
                s = s * masks[3 * i + j:3 * i + j + 1, :]
            taps.append(s)
    col = jnp.concatenate(taps, axis=0)                # (9*Cin, HW)
    return jnp.dot(w_ref[...], col, preferred_element_type=jnp.float32) + b_ref[...]


def _fcn_kernel(x_ref, w1_ref, b1_ref, w2_ref, b2_ref, w3_ref, b3_ref,
                w4_ref, b4_ref, mf_ref, mh_ref, p_ref, bt_ref, o_ref, *, W, Wf):
    x = x_ref[0]                                       # (Cin_pad, H*W)
    mf = mf_ref[...]                                   # (9, H*W)
    mh = mh_ref[...]                                   # (9, Hf*Wf)

    # ---- backbone conv1: 3x3, stride 2, pad 1, ReLU.
    # Full-resolution conv, then stride-2 subsample as one matmul against P (one-hot cols).
    a1 = _conv3x3_cols(x, w1_ref, b1_ref, mf, W)                            # (C_BB1, H*W)
    bb1 = jnp.maximum(jnp.dot(a1, p_ref[...],
                              preferred_element_type=jnp.float32), 0.0)     # (C_BB1, Hf*Wf)

    # ---- backbone conv2: 3x3, stride 1, pad 1, ReLU.
    bb2 = jnp.maximum(_conv3x3_cols(bb1, w2_ref, b2_ref, mh, Wf), 0.0)      # (C_FEAT, Hf*Wf)

    # ---- classifier conv: 3x3, stride 1, pad 1, ReLU.
    cls1 = jnp.maximum(_conv3x3_cols(bb2, w3_ref, b3_ref, mh, Wf), 0.0)     # (C_HEAD, Hf*Wf)

    # ---- 1x1 classifier BEFORE the bilinear expansion (both linear, interp rows sum to 1),
    #      then one lane-dense upsample matmul writes the (classes, H*W) logits directly.
    small = jnp.dot(w4_ref[...], cls1,
                    preferred_element_type=jnp.float32) + b4_ref[...]       # (classes, Hf*Wf)
    logits = jnp.dot(small, bt_ref[...],
                     preferred_element_type=jnp.float32)                    # (classes, H*W)
    o_ref[0] = logits.astype(o_ref.dtype)


def _fcn_forward_pallas(x_cf, w1, b1, w2, b2, w3, b3, w4, b4, mf, mh, P, btT,
                        *, n_classes, W, Wf):
    N, cpad, HW = x_cf.shape
    kernel = functools.partial(_fcn_kernel, W=W, Wf=Wf)
    c2 = lambda s: pl.BlockSpec(s, lambda b: (0, 0))   # constants: fetched once
    return pl.pallas_call(
        kernel,
        out_shape=jax.ShapeDtypeStruct((N, n_classes, HW), jnp.float32),
        grid=(N,),
        in_specs=[
            pl.BlockSpec((1, cpad, HW), lambda b: (b, 0, 0)),   # per-image input
            c2(w1.shape), c2(b1.shape),
            c2(w2.shape), c2(b2.shape),
            c2(w3.shape), c2(b3.shape),
            c2(w4.shape), c2(b4.shape),
            c2(mf.shape), c2(mh.shape), c2(P.shape), c2(btT.shape),
        ],
        out_specs=pl.BlockSpec((1, n_classes, HW), lambda b: (b, 0, 0)),
        compiler_params=pltpu.CompilerParams(
            dimension_semantics=("parallel",),          # batch axis -> both v7x TCs
        ),
    )(x_cf, w1, b1, w2, b2, w3, b3, w4, b4, mf, mh, P, btT)


# ------------------------------ JAX wrapper -----------------------------------

def _interp_matrix(out_size, in_size):
    """Row-stochastic matrix reproducing F.interpolate(mode='bilinear', align_corners=False)."""
    scale = in_size / out_size
    dst = jnp.arange(out_size, dtype=jnp.float32)
    src = jnp.maximum((dst + 0.5) * scale - 0.5, 0.0)     # PyTorch clamps negative src to 0
    i0 = jnp.clip(jnp.floor(src).astype(jnp.int32), 0, in_size - 1)
    i1 = jnp.minimum(i0 + 1, in_size - 1)
    w1 = src - i0.astype(jnp.float32)
    w0 = 1.0 - w1
    A = jnp.zeros((out_size, in_size), jnp.float32)
    A = A.at[jnp.arange(out_size), i0].add(w0)
    A = A.at[jnp.arange(out_size), i1].add(w1)
    return A


def _tap_masks(H, W):
    """masks[3*i+j, y*W+x] = 1 iff pixel (y+i-1, x+j-1) is inside the HxW map."""
    y = jnp.arange(H, dtype=jnp.int32)[:, None]
    x = jnp.arange(W, dtype=jnp.int32)[None, :]
    rows = []
    for i in range(3):
        for j in range(3):
            di, dj = i - 1, j - 1
            m = (y + di >= 0) & (y + di < H) & (x + dj >= 0) & (x + dj < W)
            rows.append(m.astype(jnp.float32).reshape(1, H * W))
    return jnp.concatenate(rows, axis=0)                   # (9, H*W)


def _subsample_matrix(H, W, Hf, Wf, stride=2):
    """One-hot P (H*W, Hf*Wf): column q selects full-res position (stride*qy, stride*qx)."""
    p = jnp.arange(H * W, dtype=jnp.int32)[:, None]
    q = jnp.arange(Hf * Wf, dtype=jnp.int32)[None, :]
    src = stride * (q // Wf) * W + stride * (q % Wf)
    return (p == src).astype(jnp.float32)


@jax.jit
def simple_segmentation_forward(params, x_nchw):
    """Mirrors _SimpleSegmentationModel.forward (export_onnx=False, aux_classifier=None)."""
    N, cin, H, W = x_nchw.shape
    Hf = (H + 2 - 3) // 2 + 1          # spatial size after the stride-2 backbone conv
    Wf = (W + 2 - 3) // 2 + 1
    cpad = (-cin) % 8                  # pad channels so the 9-tap sublane concat is 8-aligned
    cin_p = cin + cpad

    # NCHW -> (N, C, H*W): channels on sublanes, flattened spatial on lanes (no transpose).
    x_cf = x_nchw.reshape(N, cin, H * W).astype(jnp.float32)
    x_cf = jnp.pad(x_cf, ((0, 0), (0, cpad), (0, 0)))

    # Conv weights (9*Cin, Cout) -> (Cout, 9*Cin); conv1 gets zero columns for padded channels.
    w1 = jnp.pad(params["bb1_w"].reshape(9, cin, C_BB1),
                 ((0, 0), (0, cpad), (0, 0))).reshape(9 * cin_p, C_BB1).T.astype(jnp.float32)
    w2 = params["bb2_w"].T.astype(jnp.float32)              # (C_FEAT, 9*C_BB1)
    w3 = params["cls1_w"].T.astype(jnp.float32)              # (C_HEAD, 9*C_FEAT)
    w4 = params["cls2_w"].T.astype(jnp.float32)              # (classes, C_HEAD)
    b1 = params["bb1_b"].reshape(C_BB1, 1).astype(jnp.float32)
    b2 = params["bb2_b"].reshape(C_FEAT, 1).astype(jnp.float32)
    b3 = params["cls1_b"].reshape(C_HEAD, 1).astype(jnp.float32)
    b4 = params["cls2_b"].reshape(NUM_CLASSES, 1).astype(jnp.float32)

    mf = _tap_masks(H, W)                                    # (9, H*W) border masks
    mh = _tap_masks(Hf, Wf)                                  # (9, Hf*Wf)
    P = _subsample_matrix(H, W, Hf, Wf)                      # (H*W, Hf*Wf) stride-2 select
    # Bt^T[h*Wf+w, y*W+x] = Ah[y,h] * Aw[x,w]  (dyadic weights -> exact).
    btT = jnp.kron(_interp_matrix(H, Hf), _interp_matrix(W, Wf)).T.astype(jnp.float32)
    # TODO(synk): at real segmentation resolutions keep the upsample separable (Ah then Aw)
    #             instead of the dense kron matrix (O(H*W * Hf*Wf) memory).

    out_flat = _fcn_forward_pallas(x_cf, w1, b1, w2, b2, w3, b3, w4, b4, mf, mh, P, btT,
                                   n_classes=NUM_CLASSES, W=W, Wf=Wf)

    result = OrderedDict()
    result["out"] = out_flat.reshape(N, NUM_CLASSES, H, W)   # lane-dense (N, C, H*W) -> NCHW
    return result


# --------------------------- synthetic parameters -----------------------------

def make_params():
    """Deterministic synthetic weights (this module takes backbone/classifier as args)."""
    keys = jax.random.split(jax.random.PRNGKey(0), 8)

    def w(key, fan_in, cout):
        return (jax.random.normal(key, (fan_in, cout), jnp.float32)
                / jnp.sqrt(jnp.float32(fan_in)))

    def b(key, cout):
        return 0.01 * jax.random.normal(key, (cout,), jnp.float32)

    return {
        # synthetic ResNet-ish backbone: conv3x3/s2 + ReLU, conv3x3/s1 + ReLU -> features['out']
        "bb1_w": w(keys[0], 3 * 3 * C_IN, C_BB1),   "bb1_b": b(keys[1], C_BB1),
        "bb2_w": w(keys[2], 3 * 3 * C_BB1, C_FEAT), "bb2_b": b(keys[3], C_FEAT),
        # FCNHead-style classifier: conv3x3 + ReLU, conv1x1 -> num_classes
        "cls1_w": w(keys[4], 3 * 3 * C_FEAT, C_HEAD), "cls1_b": b(keys[5], C_HEAD),
        "cls2_w": w(keys[6], 1 * 1 * C_HEAD, NUM_CLASSES), "cls2_b": b(keys[7], NUM_CLASSES),
    }


# --------------------------- pure-JAX reference --------------------------------

def _reference_forward(params, x_nchw):
    """f32 op-by-op reference (im2col convs + separable bilinear) for validation only."""
    N, cin, H, W = x_nchw.shape
    x = jnp.transpose(x_nchw, (0, 2, 3, 1)).astype(jnp.float32)
    hp = jax.lax.Precision.HIGHEST

    def conv(x, w, b, kh, kw, stride, pad, relu):
        n, h, wd, c = x.shape
        xp = jnp.pad(x, ((0, 0), (pad, pad), (pad, pad), (0, 0)))
        ho = (h + 2 * pad - kh) // stride + 1
        wo = (wd + 2 * pad - kw) // stride + 1
        cols = []
        for i in range(kh):
            for j in range(kw):
                cols.append(xp[:, i:i + ho * stride:stride, j:j + wo * stride:stride, :])
        patches = jnp.concatenate(cols, axis=-1).reshape(n * ho * wo, kh * kw * c)
        out = jnp.dot(patches, w, precision=hp) + b
        if relu:
            out = jnp.maximum(out, 0.0)
        return out.reshape(n, ho, wo, -1)

    f = conv(x, params["bb1_w"], params["bb1_b"], 3, 3, 2, 1, True)
    f = conv(f, params["bb2_w"], params["bb2_b"], 3, 3, 1, 1, True)
    f = conv(f, params["cls1_w"], params["cls1_b"], 3, 3, 1, 1, True)
    f = conv(f, params["cls2_w"], params["cls2_b"], 1, 1, 1, 0, False)
    Ah = _interp_matrix(H, f.shape[1])
    Aw = _interp_matrix(W, f.shape[2])
    return jnp.einsum("yh,nhwc,xw->ncyx", Ah, f, Aw, precision=hp)


# ---------------------------------- main ---------------------------------------

if __name__ == "__main__":
    params = make_params()
    x = jax.random.normal(jax.random.PRNGKey(0), (2, C_IN, 16, 16), jnp.float32)

    result = simple_segmentation_forward(params, x)
    out = jax.block_until_ready(result["out"])

    assert out.shape == (2, NUM_CLASSES, 16, 16), out.shape
    assert out.dtype == jnp.float32
    assert bool(jnp.all(jnp.isfinite(out)))

    # Validate against the f32 reference (kernel is f32 end-to-end now).
    ref = _reference_forward(params, x)
    err = float(jnp.max(jnp.abs(out - ref)))
    assert err < 5e-3, f"max abs err vs reference = {err}"

    print("KERNEL_OK")
</pallas_src>

<mosaic_0001>
module attributes {stable_mosaic.version = 11 : i64} {
  func.func private @main(%arg0: i32) attributes {dimension_semantics = [#tpu.dimension_semantics<core_parallel>], iteration_bounds = array<i64: 2>, tpu.core_type = #tpu.core_type<sc_scalar_subcore>, window_params = []} {
    return
  }
}

module attributes {stable_mosaic.version = 11 : i64} {
  func.func private @main(%arg0: i32) attributes {dimension_semantics = [#tpu.dimension_semantics<core_parallel>], iteration_bounds = array<i64: 2>, tpu.core_type = #tpu.core_type<sc_scalar_subcore>, window_params = []} {
    return
  }
}

module attributes {stable_mosaic.version = 11 : i64} {
  func.func @_fcn_kernel(%arg0: i32, %arg1: memref<1x8x256xf32, #tpu.memory_space<vmem>>, %arg2: memref<16x72xf32, #tpu.memory_space<vmem>>, %arg3: memref<16x1xf32, #tpu.memory_space<vmem>>, %arg4: memref<32x144xf32, #tpu.memory_space<vmem>>, %arg5: memref<32x1xf32, #tpu.memory_space<vmem>>, %arg6: memref<16x288xf32, #tpu.memory_space<vmem>>, %arg7: memref<16x1xf32, #tpu.memory_space<vmem>>, %arg8: memref<5x16xf32, #tpu.memory_space<vmem>>, %arg9: memref<5x1xf32, #tpu.memory_space<vmem>>, %arg10: memref<9x256xf32, #tpu.memory_space<vmem>>, %arg11: memref<9x64xf32, #tpu.memory_space<vmem>>, %arg12: memref<256x64xf32, #tpu.memory_space<vmem>>, %arg13: memref<64x256xf32, #tpu.memory_space<vmem>>, %arg14: memref<1x5x256xf32, #tpu.memory_space<vmem>>) attributes {dimension_semantics = [#tpu.dimension_semantics<parallel>], iteration_bounds = array<i64: 2>, scalar_prefetch = 0 : i64, scratch_operands = 0 : i64, tpu.core_type = #tpu.core_type<tc>, window_params = [{transform_indices = @transform_0, window_bounds = array<i64: 1, 8, 256>}, {pipeline_mode = #tpu.pipeline_mode<synchronous>, transform_indices = @transform_1, window_bounds = array<i64: 16, 72>}, {pipeline_mode = #tpu.pipeline_mode<synchronous>, transform_indices = @transform_2, window_bounds = array<i64: 16, 1>}, {pipeline_mode = #tpu.pipeline_mode<synchronous>, transform_indices = @transform_3, window_bounds = array<i64: 32, 144>}, {pipeline_mode = #tpu.pipeline_mode<synchronous>, transform_indices = @transform_4, window_bounds = array<i64: 32, 1>}, {pipeline_mode = #tpu.pipeline_mode<synchronous>, transform_indices = @transform_5, window_bounds = array<i64: 16, 288>}, {pipeline_mode = #tpu.pipeline_mode<synchronous>, transform_indices = @transform_6, window_bounds = array<i64: 16, 1>}, {pipeline_mode = #tpu.pipeline_mode<synchronous>, transform_indices = @transform_7, window_bounds = array<i64: 5, 16>}, {pipeline_mode = #tpu.pipeline_mode<synchronous>, transform_indices = @transform_8, window_bounds = array<i64: 5, 1>}, {pipeline_mode = #tpu.pipeline_mode<synchronous>, transform_indices = @transform_9, window_bounds = array<i64: 9, 256>}, {pipeline_mode = #tpu.pipeline_mode<synchronous>, transform_indices = @transform_10, window_bounds = array<i64: 9, 64>}, {pipeline_mode = #tpu.pipeline_mode<synchronous>, transform_indices = @transform_11, window_bounds = array<i64: 256, 64>}, {pipeline_mode = #tpu.pipeline_mode<synchronous>, transform_indices = @transform_12, window_bounds = array<i64: 64, 256>}, {transform_indices = @transform_13, window_bounds = array<i64: 1, 5, 256>}]} {
    %c0 = arith.constant 0 : index
    %c0_0 = arith.constant 0 : index
    %c0_1 = arith.constant 0 : index
    %0 = vector.load %arg1[%c0, %c0_0, %c0_1] : memref<1x8x256xf32, #tpu.memory_space<vmem>>, vector<1x8x256xf32>
    %1 = vector.shape_cast %0 : vector<1x8x256xf32> to vector<8x256xf32>
    %c0_2 = arith.constant 0 : index
    %c0_3 = arith.constant 0 : index
    %2 = vector.load %arg10[%c0_2, %c0_3] : memref<9x256xf32, #tpu.memory_space<vmem>>, vector<9x256xf32>
    %c0_4 = arith.constant 0 : index
    %c0_5 = arith.constant 0 : index
    %3 = vector.load %arg11[%c0_4, %c0_5] : memref<9x64xf32, #tpu.memory_space<vmem>>, vector<9x64xf32>
    %cst = arith.constant 0.000000e+00 : f32
    %4 = vector.broadcast %cst : f32 to vector<8x17xf32>
    %5 = tpu.concatenate %4, %1, %4 in 1 : vector<8x17xf32>, vector<8x256xf32>, vector<8x17xf32> -> vector<8x290xf32>
    %6 = vector.extract_strided_slice %5 {offsets = [0, 0], sizes = [8, 256], strides = [1, 1]} : vector<8x290xf32> to vector<8x256xf32>
    %7 = vector.extract_strided_slice %2 {offsets = [0, 0], sizes = [1, 256], strides = [1, 1]} : vector<9x256xf32> to vector<1x256xf32>
    %8 = vector.broadcast %7 : vector<1x256xf32> to vector<8x256xf32>
    %9 = arith.mulf %6, %8 : vector<8x256xf32>
    %10 = vector.extract_strided_slice %5 {offsets = [0, 1], sizes = [8, 256], strides = [1, 1]} : vector<8x290xf32> to vector<8x256xf32>
    %11 = vector.extract_strided_slice %2 {offsets = [1, 0], sizes = [1, 256], strides = [1, 1]} : vector<9x256xf32> to vector<1x256xf32>
    %12 = vector.broadcast %11 : vector<1x256xf32> to vector<8x256xf32>
    %13 = arith.mulf %10, %12 : vector<8x256xf32>
    %14 = vector.extract_strided_slice %5 {offsets = [0, 2], sizes = [8, 256], strides = [1, 1]} : vector<8x290xf32> to vector<8x256xf32>
    %15 = vector.extract_strided_slice %2 {offsets = [2, 0], sizes = [1, 256], strides = [1, 1]} : vector<9x256xf32> to vector<1x256xf32>
    %16 = vector.broadcast %15 : vector<1x256xf32> to vector<8x256xf32>
    %17 = arith.mulf %14, %16 : vector<8x256xf32>
    %18 = vector.extract_strided_slice %5 {offsets = [0, 16], sizes = [8, 256], strides = [1, 1]} : vector<8x290xf32> to vector<8x256xf32>
    %19 = vector.extract_strided_slice %2 {offsets = [3, 0], sizes = [1, 256], strides = [1, 1]} : vector<9x256xf32> to vector<1x256xf32>
    %20 = vector.broadcast %19 : vector<1x256xf32> to vector<8x256xf32>
    %21 = arith.mulf %18, %20 : vector<8x256xf32>
    %22 = vector.extract_strided_slice %5 {offsets = [0, 17], sizes = [8, 256], strides = [1, 1]} : vector<8x290xf32> to vector<8x256xf32>
    %23 = vector.extract_strided_slice %5 {offsets = [0, 18], sizes = [8, 256], strides = [1, 1]} : vector<8x290xf32> to vector<8x256xf32>
    %24 = vector.extract_strided_slice %2 {offsets = [5, 0], sizes = [1, 256], strides = [1, 1]} : vector<9x256xf32> to vector<1x256xf32>
    %25 = vector.broadcast %24 : vector<1x256xf32> to vector<8x256xf32>
    %26 = arith.mulf %23, %25 : vector<8x256xf32>
    %27 = vector.extract_strided_slice %5 {offsets = [0, 32], sizes = [8, 256], strides = [1, 1]} : vector<8x290xf32> to vector<8x256xf32>
    %28 = vector.extract_strided_slice %2 {offsets = [6, 0], sizes = [1, 256], strides = [1, 1]} : vector<9x256xf32> to vector<1x256xf32>
    %29 = vector.broadcast %28 : vector<1x256xf32> to vector<8x256xf32>
    %30 = arith.mulf %27, %29 : vector<8x256xf32>
    %31 = vector.extract_strided_slice %5 {offsets = [0, 33], sizes = [8, 256], strides = [1, 1]} : vector<8x290xf32> to vector<8x256xf32>
    %32 = vector.extract_strided_slice %2 {offsets = [7, 0], sizes = [1, 256], strides = [1, 1]} : vector<9x256xf32> to vector<1x256xf32>
    %33 = vector.broadcast %32 : vector<1x256xf32> to vector<8x256xf32>
    %34 = arith.mulf %31, %33 : vector<8x256xf32>
    %35 = vector.extract_strided_slice %5 {offsets = [0, 34], sizes = [8, 256], strides = [1, 1]} : vector<8x290xf32> to vector<8x256xf32>
    %36 = vector.extract_strided_slice %2 {offsets = [8, 0], sizes = [1, 256], strides = [1, 1]} : vector<9x256xf32> to vector<1x256xf32>
    %37 = vector.broadcast %36 : vector<1x256xf32> to vector<8x256xf32>
    %38 = arith.mulf %35, %37 : vector<8x256xf32>
    %39 = tpu.concatenate %9, %13, %17, %21, %22, %26, %30, %34, %38 in 0 : vector<8x256xf32>, vector<8x256xf32>, vector<8x256xf32>, vector<8x256xf32>, vector<8x256xf32>, vector<8x256xf32>, vector<8x256xf32>, vector<8x256xf32>, vector<8x256xf32> -> vector<72x256xf32>
    %c0_6 = arith.constant 0 : index
    %c0_7 = arith.constant 0 : index
    %40 = vector.load %arg2[%c0_6, %c0_7] : memref<16x72xf32, #tpu.memory_space<vmem>>, vector<16x72xf32>
    %cst_8 = arith.constant dense<0.000000e+00> : vector<16x256xf32>
    %41 = tpu.matmul %40, %39, %cst_8 {dimension_numbers = #tpu.dot_dimension_numbers<[1], [0], [0], [1], [0, 0, 1, 1], [], []>} : vector<16x72xf32>, vector<72x256xf32>, vector<16x256xf32> -> vector<16x256xf32>
    %c0_9 = arith.constant 0 : index
    %c0_10 = arith.constant 0 : index
    %42 = vector.load %arg3[%c0_9, %c0_10] : memref<16x1xf32, #tpu.memory_space<vmem>>, vector<16x1xf32>
    %43 = vector.broadcast %42 : vector<16x1xf32> to vector<16x256xf32>
    %44 = arith.addf %41, %43 : vector<16x256xf32>
    %c0_11 = arith.constant 0 : index
    %c0_12 = arith.constant 0 : index
    %45 = vector.load %arg12[%c0_11, %c0_12] : memref<256x64xf32, #tpu.memory_space<vmem>>, vector<256x64xf32>
    %cst_13 = arith.constant dense<0.000000e+00> : vector<16x64xf32>
    %46 = tpu.matmul %44, %45, %cst_13 {dimension_numbers = #tpu.dot_dimension_numbers<[1], [0], [0], [1], [0, 0, 1, 1], [], []>} : vector<16x256xf32>, vector<256x64xf32>, vector<16x64xf32> -> vector<16x64xf32>
    %cst_14 = arith.constant 0.000000e+00 : f32
    %47 = vector.broadcast %cst_14 : f32 to vector<16x64xf32>
    %48 = arith.maximumf %46, %47 : vector<16x64xf32>
    %cst_15 = arith.constant 0.000000e+00 : f32
    %49 = vector.broadcast %cst_15 : f32 to vector<16x9xf32>
    %50 = tpu.concatenate %49, %48, %49 in 1 : vector<16x9xf32>, vector<16x64xf32>, vector<16x9xf32> -> vector<16x82xf32>
    %51 = vector.extract_strided_slice %50 {offsets = [0, 0], sizes = [16, 64], strides = [1, 1]} : vector<16x82xf32> to vector<16x64xf32>
    %52 = vector.extract_strided_slice %3 {offsets = [0, 0], sizes = [1, 64], strides = [1, 1]} : vector<9x64xf32> to vector<1x64xf32>
    %53 = vector.broadcast %52 : vector<1x64xf32> to vector<16x64xf32>
    %54 = arith.mulf %51, %53 : vector<16x64xf32>
    %55 = vector.extract_strided_slice %50 {offsets = [0, 1], sizes = [16, 64], strides = [1, 1]} : vector<16x82xf32> to vector<16x64xf32>
    %56 = vector.extract_strided_slice %3 {offsets = [1, 0], sizes = [1, 64], strides = [1, 1]} : vector<9x64xf32> to vector<1x64xf32>
    %57 = vector.broadcast %56 : vector<1x64xf32> to vector<16x64xf32>
    %58 = arith.mulf %55, %57 : vector<16x64xf32>
    %59 = vector.extract_strided_slice %50 {offsets = [0, 2], sizes = [16, 64], strides = [1, 1]} : vector<16x82xf32> to vector<16x64xf32>
    %60 = vector.extract_strided_slice %3 {offsets = [2, 0], sizes = [1, 64], strides = [1, 1]} : vector<9x64xf32> to vector<1x64xf32>
    %61 = vector.broadcast %60 : vector<1x64xf32> to vector<16x64xf32>
    %62 = arith.mulf %59, %61 : vector<16x64xf32>
    %63 = vector.extract_strided_slice %50 {offsets = [0, 8], sizes = [16, 64], strides = [1, 1]} : vector<16x82xf32> to vector<16x64xf32>
    %64 = vector.extract_strided_slice %3 {offsets = [3, 0], sizes = [1, 64], strides = [1, 1]} : vector<9x64xf32> to vector<1x64xf32>
    %65 = vector.broadcast %64 : vector<1x64xf32> to vector<16x64xf32>
    %66 = arith.mulf %63, %65 : vector<16x64xf32>
    %67 = vector.extract_strided_slice %50 {offsets = [0, 9], sizes = [16, 64], strides = [1, 1]} : vector<16x82xf32> to vector<16x64xf32>
    %68 = vector.extract_strided_slice %50 {offsets = [0, 10], sizes = [16, 64], strides = [1, 1]} : vector<16x82xf32> to vector<16x64xf32>
    %69 = vector.extract_strided_slice %3 {offsets = [5, 0], sizes = [1, 64], strides = [1, 1]} : vector<9x64xf32> to vector<1x64xf32>
    %70 = vector.broadcast %69 : vector<1x64xf32> to vector<16x64xf32>
    %71 = arith.mulf %68, %70 : vector<16x64xf32>
    %72 = vector.extract_strided_slice %50 {offsets = [0, 16], sizes = [16, 64], strides = [1, 1]} : vector<16x82xf32> to vector<16x64xf32>
    %73 = vector.extract_strided_slice %3 {offsets = [6, 0], sizes = [1, 64], strides = [1, 1]} : vector<9x64xf32> to vector<1x64xf32>
    %74 = vector.broadcast %73 : vector<1x64xf32> to vector<16x64xf32>
    %75 = arith.mulf %72, %74 : vector<16x64xf32>
    %76 = vector.extract_strided_slice %50 {offsets = [0, 17], sizes = [16, 64], strides = [1, 1]} : vector<16x82xf32> to vector<16x64xf32>
    %77 = vector.extract_strided_slice %3 {offsets = [7, 0], sizes = [1, 64], strides = [1, 1]} : vector<9x64xf32> to vector<1x64xf32>
    %78 = vector.broadcast %77 : vector<1x64xf32> to vector<16x64xf32>
    %79 = arith.mulf %76, %78 : vector<16x64xf32>
    %80 = vector.extract_strided_slice %50 {offsets = [0, 18], sizes = [16, 64], strides = [1, 1]} : vector<16x82xf32> to vector<16x64xf32>
    %81 = vector.extract_strided_slice %3 {offsets = [8, 0], sizes = [1, 64], strides = [1, 1]} : vector<9x64xf32> to vector<1x64xf32>
    %82 = vector.broadcast %81 : vector<1x64xf32> to vector<16x64xf32>
    %83 = arith.mulf %80, %82 : vector<16x64xf32>
    %84 = tpu.concatenate %54, %58, %62, %66, %67, %71, %75, %79, %83 in 0 : vector<16x64xf32>, vector<16x64xf32>, vector<16x64xf32>, vector<16x64xf32>, vector<16x64xf32>, vector<16x64xf32>, vector<16x64xf32>, vector<16x64xf32>, vector<16x64xf32> -> vector<144x64xf32>
    %c0_16 = arith.constant 0 : index
    %c0_17 = arith.constant 0 : index
    %85 = vector.load %arg4[%c0_16, %c0_17] : memref<32x144xf32, #tpu.memory_space<vmem>>, vector<32x144xf32>
    %cst_18 = arith.constant dense<0.000000e+00> : vector<32x64xf32>
    %86 = tpu.matmul %85, %84, %cst_18 {dimension_numbers = #tpu.dot_dimension_numbers<[1], [0], [0], [1], [0, 0, 1, 1], [], []>} : vector<32x144xf32>, vector<144x64xf32>, vector<32x64xf32> -> vector<32x64xf32>
    %c0_19 = arith.constant 0 : index
    %c0_20 = arith.constant 0 : index
    %87 = vector.load %arg5[%c0_19, %c0_20] : memref<32x1xf32, #tpu.memory_space<vmem>>, vector<32x1xf32>
    %88 = vector.broadcast %87 : vector<32x1xf32> to vector<32x64xf32>
    %89 = arith.addf %86, %88 : vector<32x64xf32>
    %cst_21 = arith.constant 0.000000e+00 : f32
    %90 = vector.broadcast %cst_21 : f32 to vector<32x64xf32>
    %91 = arith.maximumf %89, %90 : vector<32x64xf32>
    %cst_22 = arith.constant 0.000000e+00 : f32
    %92 = vector.broadcast %cst_22 : f32 to vector<32x9xf32>
    %93 = tpu.concatenate %92, %91, %92 in 1 : vector<32x9xf32>, vector<32x64xf32>, vector<32x9xf32> -> vector<32x82xf32>
    %94 = vector.extract_strided_slice %93 {offsets = [0, 0], sizes = [32, 64], strides = [1, 1]} : vector<32x82xf32> to vector<32x64xf32>
    %95 = vector.extract_strided_slice %3 {offsets = [0, 0], sizes = [1, 64], strides = [1, 1]} : vector<9x64xf32> to vector<1x64xf32>
    %96 = vector.broadcast %95 : vector<1x64xf32> to vector<32x64xf32>
    %97 = arith.mulf %94, %96 : vector<32x64xf32>
    %98 = vector.extract_strided_slice %93 {offsets = [0, 1], sizes = [32, 64], strides = [1, 1]} : vector<32x82xf32> to vector<32x64xf32>
    %99 = vector.extract_strided_slice %3 {offsets = [1, 0], sizes = [1, 64], strides = [1, 1]} : vector<9x64xf32> to vector<1x64xf32>
    %100 = vector.broadcast %99 : vector<1x64xf32> to vector<32x64xf32>
    %101 = arith.mulf %98, %100 : vector<32x64xf32>
    %102 = vector.extract_strided_slice %93 {offsets = [0, 2], sizes = [32, 64], strides = [1, 1]} : vector<32x82xf32> to vector<32x64xf32>
    %103 = vector.extract_strided_slice %3 {offsets = [2, 0], sizes = [1, 64], strides = [1, 1]} : vector<9x64xf32> to vector<1x64xf32>
    %104 = vector.broadcast %103 : vector<1x64xf32> to vector<32x64xf32>
    %105 = arith.mulf %102, %104 : vector<32x64xf32>
    %106 = vector.extract_strided_slice %93 {offsets = [0, 8], sizes = [32, 64], strides = [1, 1]} : vector<32x82xf32> to vector<32x64xf32>
    %107 = vector.extract_strided_slice %3 {offsets = [3, 0], sizes = [1, 64], strides = [1, 1]} : vector<9x64xf32> to vector<1x64xf32>
    %108 = vector.broadcast %107 : vector<1x64xf32> to vector<32x64xf32>
    %109 = arith.mulf %106, %108 : vector<32x64xf32>
    %110 = vector.extract_strided_slice %93 {offsets = [0, 9], sizes = [32, 64], strides = [1, 1]} : vector<32x82xf32> to vector<32x64xf32>
    %111 = vector.extract_strided_slice %93 {offsets = [0, 10], sizes = [32, 64], strides = [1, 1]} : vector<32x82xf32> to vector<32x64xf32>
    %112 = vector.extract_strided_slice %3 {offsets = [5, 0], sizes = [1, 64], strides = [1, 1]} : vector<9x64xf32> to vector<1x64xf32>
    %113 = vector.broadcast %112 : vector<1x64xf32> to vector<32x64xf32>
    %114 = arith.mulf %111, %113 : vector<32x64xf32>
    %115 = vector.extract_strided_slice %93 {offsets = [0, 16], sizes = [32, 64], strides = [1, 1]} : vector<32x82xf32> to vector<32x64xf32>
    %116 = vector.extract_strided_slice %3 {offsets = [6, 0], sizes = [1, 64], strides = [1, 1]} : vector<9x64xf32> to vector<1x64xf32>
    %117 = vector.broadcast %116 : vector<1x64xf32> to vector<32x64xf32>
    %118 = arith.mulf %115, %117 : vector<32x64xf32>
    %119 = vector.extract_strided_slice %93 {offsets = [0, 17], sizes = [32, 64], strides = [1, 1]} : vector<32x82xf32> to vector<32x64xf32>
    %120 = vector.extract_strided_slice %3 {offsets = [7, 0], sizes = [1, 64], strides = [1, 1]} : vector<9x64xf32> to vector<1x64xf32>
    %121 = vector.broadcast %120 : vector<1x64xf32> to vector<32x64xf32>
    %122 = arith.mulf %119, %121 : vector<32x64xf32>
    %123 = vector.extract_strided_slice %93 {offsets = [0, 18], sizes = [32, 64], strides = [1, 1]} : vector<32x82xf32> to vector<32x64xf32>
    %124 = vector.extract_strided_slice %3 {offsets = [8, 0], sizes = [1, 64], strides = [1, 1]} : vector<9x64xf32> to vector<1x64xf32>
    %125 = vector.broadcast %124 : vector<1x64xf32> to vector<32x64xf32>
    %126 = arith.mulf %123, %125 : vector<32x64xf32>
    %127 = tpu.concatenate %97, %101, %105, %109, %110, %114, %118, %122, %126 in 0 : vector<32x64xf32>, vector<32x64xf32>, vector<32x64xf32>, vector<32x64xf32>, vector<32x64xf32>, vector<32x64xf32>, vector<32x64xf32>, vector<32x64xf32>, vector<32x64xf32> -> vector<288x64xf32>
    %c0_23 = arith.constant 0 : index
    %c0_24 = arith.constant 0 : index
    %128 = vector.load %arg6[%c0_23, %c0_24] : memref<16x288xf32, #tpu.memory_space<vmem>>, vector<16x288xf32>
    %cst_25 = arith.constant dense<0.000000e+00> : vector<16x64xf32>
    %129 = tpu.matmul %128, %127, %cst_25 {dimension_numbers = #tpu.dot_dimension_numbers<[1], [0], [0], [1], [0, 0, 1, 1], [], []>} : vector<16x288xf32>, vector<288x64xf32>, vector<16x64xf32> -> vector<16x64xf32>
    %c0_26 = arith.constant 0 : index
    %c0_27 = arith.constant 0 : index
    %130 = vector.load %arg7[%c0_26, %c0_27] : memref<16x1xf32, #tpu.memory_space<vmem>>, vector<16x1xf32>
    %131 = vector.broadcast %130 : vector<16x1xf32> to vector<16x64xf32>
    %132 = arith.addf %129, %131 : vector<16x64xf32>
    %cst_28 = arith.constant 0.000000e+00 : f32
    %133 = vector.broadcast %cst_28 : f32 to vector<16x64xf32>
    %134 = arith.maximumf %132, %133 : vector<16x64xf32>
    %c0_29 = arith.constant 0 : index
    %c0_30 = arith.constant 0 : index
    %135 = vector.load %arg8[%c0_29, %c0_30] : memref<5x16xf32, #tpu.memory_space<vmem>>, vector<5x16xf32>
    %cst_31 = arith.constant dense<0.000000e+00> : vector<5x64xf32>
    %136 = tpu.matmul %135, %134, %cst_31 {dimension_numbers = #tpu.dot_dimension_numbers<[1], [0], [0], [1], [0, 0, 1, 1], [], []>} : vector<5x16xf32>, vector<16x64xf32>, vector<5x64xf32> -> vector<5x64xf32>
    %c0_32 = arith.constant 0 : index
    %c0_33 = arith.constant 0 : index
    %137 = vector.load %arg9[%c0_32, %c0_33] : memref<5x1xf32, #tpu.memory_space<vmem>>, vector<5x1xf32>
    %138 = vector.broadcast %137 : vector<5x1xf32> to vector<5x64xf32>
    %139 = arith.addf %136, %138 : vector<5x64xf32>
    %c0_34 = arith.constant 0 : index
    %c0_35 = arith.constant 0 : index
    %140 = vector.load %arg13[%c0_34, %c0_35] : memref<64x256xf32, #tpu.memory_space<vmem>>, vector<64x256xf32>
    %cst_36 = arith.constant dense<0.000000e+00> : vector<5x256xf32>
    %141 = tpu.matmul %139, %140, %cst_36 {dimension_numbers = #tpu.dot_dimension_numbers<[1], [0], [0], [1], [0, 0, 1, 1], [], []>} : vector<5x64xf32>, vector<64x256xf32>, vector<5x256xf32> -> vector<5x256xf32>
    %c0_37 = arith.constant 0 : index
    %c0_38 = arith.constant 0 : index
    %c0_39 = arith.constant 0 : index
    %142 = vector.load %arg14[%c0_37, %c0_38, %c0_39] : memref<1x5x256xf32, #tpu.memory_space<vmem>>, vector<1x5x256xf32>
    %143 = vector.shape_cast %142 : vector<1x5x256xf32> to vector<5x256xf32>
    %144 = vector.shape_cast %141 : vector<5x256xf32> to vector<1x5x256xf32>
    tpu.vector_store %arg14[%c0_37, %c0_38, %c0_39], %144 {strides = array<i32>} : memref<1x5x256xf32, #tpu.memory_space<vmem>>, vector<1x5x256xf32>,
    return
  }
  func.func @transform_0(%arg0: i32) -> (i32, i32, i32) {
    %c0_i32 = arith.constant 0 : i32
    %c0_i32_0 = arith.constant 0 : i32
    %c0_i32_1 = arith.constant 0 : i32
    return %arg0, %c0_i32, %c0_i32_0 : i32, i32, i32
  }
  func.func @transform_1(%arg0: i32) -> (i32, i32) {
    %c0_i32 = arith.constant 0 : i32
    %c0_i32_0 = arith.constant 0 : i32
    %c0_i32_1 = arith.constant 0 : i32
    return %c0_i32, %c0_i32_0 : i32, i32
  }
  func.func @transform_2(%arg0: i32) -> (i32, i32) {
    %c0_i32 = arith.constant 0 : i32
    %c0_i32_0 = arith.constant 0 : i32
    %c0_i32_1 = arith.constant 0 : i32
    return %c0_i32, %c0_i32_0 : i32, i32
  }
  func.func @transform_3(%arg0: i32) -> (i32, i32) {
    %c0_i32 = arith.constant 0 : i32
    %c0_i32_0 = arith.constant 0 : i32
    %c0_i32_1 = arith.constant 0 : i32
    return %c0_i32, %c0_i32_0 : i32, i32
  }
  func.func @transform_4(%arg0: i32) -> (i32, i32) {
    %c0_i32 = arith.constant 0 : i32
    %c0_i32_0 = arith.constant 0 : i32
    %c0_i32_1 = arith.constant 0 : i32
    return %c0_i32, %c0_i32_0 : i32, i32
  }
  func.func @transform_5(%arg0: i32) -> (i32, i32) {
    %c0_i32 = arith.constant 0 : i32
    %c0_i32_0 = arith.constant 0 : i32
    %c0_i32_1 = arith.constant 0 : i32
    return %c0_i32, %c0_i32_0 : i32, i32
  }
  func.func @transform_6(%arg0: i32) -> (i32, i32) {
    %c0_i32 = arith.constant 0 : i32
    %c0_i32_0 = arith.constant 0 : i32
    %c0_i32_1 = arith.constant 0 : i32
    return %c0_i32, %c0_i32_0 : i32, i32
  }
  func.func @transform_7(%arg0: i32) -> (i32, i32) {
    %c0_i32 = arith.constant 0 : i32
    %c0_i32_0 = arith.constant 0 : i32
    %c0_i32_1 = arith.constant 0 : i32
    return %c0_i32, %c0_i32_0 : i32, i32
  }
  func.func @transform_8(%arg0: i32) -> (i32, i32) {
    %c0_i32 = arith.constant 0 : i32
    %c0_i32_0 = arith.constant 0 : i32
    %c0_i32_1 = arith.constant 0 : i32
    return %c0_i32, %c0_i32_0 : i32, i32
  }
  func.func @transform_9(%arg0: i32) -> (i32, i32) {
    %c0_i32 = arith.constant 0 : i32
    %c0_i32_0 = arith.constant 0 : i32
    %c0_i32_1 = arith.constant 0 : i32
    return %c0_i32, %c0_i32_0 : i32, i32
  }
  func.func @transform_10(%arg0: i32) -> (i32, i32) {
    %c0_i32 = arith.constant 0 : i32
    %c0_i32_0 = arith.constant 0 : i32
    %c0_i32_1 = arith.constant 0 : i32
    return %c0_i32, %c0_i32_0 : i32, i32
  }
  func.func @transform_11(%arg0: i32) -> (i32, i32) {
    %c0_i32 = arith.constant 0 : i32
    %c0_i32_0 = arith.constant 0 : i32
    %c0_i32_1 = arith.constant 0 : i32
    return %c0_i32, %c0_i32_0 : i32, i32
  }
  func.func @transform_12(%arg0: i32) -> (i32, i32) {
    %c0_i32 = arith.constant 0 : i32
    %c0_i32_0 = arith.constant 0 : i32
    %c0_i32_1 = arith.constant 0 : i32
    return %c0_i32, %c0_i32_0 : i32, i32
  }
  func.func @transform_13(%arg0: i32) -> (i32, i32, i32) {
    %c0_i32 = arith.constant 0 : i32
    %c0_i32_0 = arith.constant 0 : i32
    %c0_i32_1 = arith.constant 0 : i32
    return %arg0, %c0_i32, %c0_i32_0 : i32, i32, i32
  }
}

</mosaic_0001>

<llo_original>
// kernel: simple_segmentation_forward.1
$region0: #{simple_segmentation_forward.1}
  #allocation0 [shape = 'u32[]', space=smem, size = 0x4, offset = 0x4, fixed_abs, tag = 'smem constant byte address 0x4 - core index']
  #allocation1 [shape = 'u32[144,128]{1,0:T(1,128)}', space=vmem, size = 0x12000, scoped, tag = 'internal scratch']
  %s0 = inlined_call_operand.vmem [shape: f32[2,8,256], index: 0, kind: input, shape index: {}]
  %s1 = inlined_call_operand.vmem [shape: f32[16,72], index: 1, kind: input, shape index: {}]
  %s2 = inlined_call_operand.vmem [shape: f32[16,1], index: 2, kind: input, shape index: {}]
  %s3 = inlined_call_operand.vmem [shape: f32[32,144], index: 3, kind: input, shape index: {}]
  %s4 = inlined_call_operand.vmem [shape: f32[32,1], index: 4, kind: input, shape index: {}]
  %s5 = inlined_call_operand.vmem [shape: f32[16,288], index: 5, kind: input, shape index: {}]
  %s6 = inlined_call_operand.vmem [shape: f32[16,1], index: 6, kind: input, shape index: {}]
  %s7 = inlined_call_operand.vmem [shape: f32[5,16], index: 7, kind: input, shape index: {}]
  %s8 = inlined_call_operand.vmem [shape: f32[5,1], index: 8, kind: input, shape index: {}]
  %s9 = inlined_call_operand.vmem [shape: f32[9,256], index: 9, kind: input, shape index: {}]
  %s10 = inlined_call_operand.vmem [shape: f32[9,64], index: 10, kind: input, shape index: {}]
  %s11 = inlined_call_operand.vmem [shape: f32[256,64], index: 11, kind: input, shape index: {}]
  %s12 = inlined_call_operand.vmem [shape: f32[64,256], index: 12, kind: input, shape index: {}]
  %s13 = inlined_call_operand.vmem [shape: f32[2,5,256], index: 13, kind: output, shape index: {}]
  %s14 = sld [smem:[#allocation0]]
  $region85: #{simple_segmentation_forward.1} parent=0
    _
  %s16 = ssub.s32 1, %s14
  %s17 = scalar_select 0, %s16, %s14
  loop: start=0, step=1, limit=4
  $region2: #{simple_segmentation_forward.1} parent=0 // loop_pre_header
    _
  $region3: #{simple_segmentation_forward.1} parent=0 // loop_header
    %s19 = sphi 0, %s23
    %p20 = scmp.ge.s32.totalorder %s19, 4
    %s29 = sphi 0, %s31
    %s32 = sphi 0, %s29
    %s33 = sphi 0, %s32
    %s49 = sphi 0, %s33
    %s53 = sphi 0, %s53
    %s55 = sphi 0, %s53
    %s56 = sphi 0, %s55
    %s70 = sphi 0, %s56
    %s74 = sphi 0, %s74
    %s76 = sphi 0, %s74
    %s77 = sphi 0, %s76
    %s91 = sphi 0, %s77
    %s95 = sphi 0, %s95
    %s97 = sphi 0, %s95
    %s98 = sphi 0, %s97
    %s112 = sphi 0, %s98
    %s116 = sphi 0, %s116
    %s118 = sphi 0, %s116
    %s119 = sphi 0, %s118
    %s133 = sphi 0, %s119
    %s137 = sphi 0, %s137
    %s139 = sphi 0, %s137
    %s140 = sphi 0, %s139
    %s154 = sphi 0, %s140
    %s158 = sphi 0, %s158
    %s160 = sphi 0, %s158
    %s161 = sphi 0, %s160
    %s175 = sphi 0, %s161
    %s179 = sphi 0, %s179
    %s181 = sphi 0, %s179
    %s182 = sphi 0, %s181
    %s196 = sphi 0, %s182
    %s200 = sphi 0, %s200
    %s202 = sphi 0, %s200
    %s203 = sphi 0, %s202
    %s217 = sphi 0, %s203
    %s221 = sphi 0, %s221
    %s223 = sphi 0, %s221
    %s224 = sphi 0, %s223
    %s238 = sphi 0, %s224
    %s242 = sphi 0, %s242
    %s244 = sphi 0, %s242
    %s245 = sphi 0, %s244
    %s259 = sphi 0, %s245
    %s263 = sphi 0, %s263
    %s265 = sphi 0, %s263
    %s266 = sphi 0, %s265
    %s280 = sphi 0, %s266
    %s284 = sphi 0, %s284
    %s286 = sphi 0, %s284
    %s287 = sphi 0, %s286
    %s301 = sphi 0, %s287
    %s307 = sphi 0, %s309
    %s310 = sphi 0, %s307
    %s311 = sphi 0, %s310
    %s327 = sphi 0, %s311
  $region4: #{simple_segmentation_forward.1} parent=0 // loop_header_branch
    %22 = sbr.rel (%p20) target = $region8
  $region5: #{simple_segmentation_forward.1} parent=0 // loop_body
    %s24 = ssub.s32 %s19, 1
    %s25 = ssub.s32 %s19, 2
    %s26 = sadd.s32 %s19, 1
    %s27 = ssub.s32 %s19, %s26
    %p28 = scmp.eq.s32.totalorder %s27, 0
    %s30 = sadd.s32 %s29, 1
    %s31 = scalar_select %p28, %s29, %s30
    %p34 = pneg %p28
    %p35 = scmp.eq.s32.totalorder %s19, 1
    %p36 = por %p34, %p35
    %p37 = scmp.ne.s32.totalorder %s29, %s32
    %p38 = scmp.eq.s32.totalorder %s19, 0
    %p39 = por %p37, %p38
    %p40 = scmp.ne.s32.totalorder %s29, %s32
    %p41 = scmp.eq.s32.totalorder %s24, 1
    %p42 = por %p40, %p41
    %p43 = scmp.ne.s32.totalorder %s32, %s33
    %p44 = scmp.eq.s32.totalorder %s24, 0
    %p45 = por %p43, %p44
    %p46 = scmp.ne.s32.totalorder %s32, %s33
    %p47 = scmp.eq.s32.totalorder %s25, 1
    %p48 = por %p46, %p47
    %p50 = scmp.ne.s32.totalorder %s33, %s49
    %p51 = scmp.eq.s32.totalorder %s25, 0
    %p52 = por %p50, %p51
    %s54 = sadd.s32 %s53, 1
    %p57 = scmp.eq.s32.totalorder %s19, 1
    %p58 = scmp.ne.s32.totalorder %s53, %s55
    %p59 = scmp.eq.s32.totalorder %s19, 0
    %p60 = por %p58, %p59
    %p61 = scmp.ne.s32.totalorder %s53, %s55
    %p62 = scmp.eq.s32.totalorder %s24, 1
    %p63 = por %p61, %p62
    %p64 = scmp.ne.s32.totalorder %s55, %s56
    %p65 = scmp.eq.s32.totalorder %s24, 0
    %p66 = por %p64, %p65
    %p67 = scmp.ne.s32.totalorder %s55, %s56
    %p68 = scmp.eq.s32.totalorder %s25, 1
    %p69 = por %p67, %p68
    %p71 = scmp.ne.s32.totalorder %s56, %s70
    %p72 = scmp.eq.s32.totalorder %s25, 0
    %p73 = por %p71, %p72
    %s75 = sadd.s32 %s74, 1
    %p78 = scmp.eq.s32.totalorder %s19, 1
    %p79 = scmp.ne.s32.totalorder %s74, %s76
    %p80 = scmp.eq.s32.totalorder %s19, 0
    %p81 = por %p79, %p80
    %p82 = scmp.ne.s32.totalorder %s74, %s76
    %p83 = scmp.eq.s32.totalorder %s24, 1
    %p84 = por %p82, %p83
    %p85 = scmp.ne.s32.totalorder %s76, %s77
    %p86 = scmp.eq.s32.totalorder %s24, 0
    %p87 = por %p85, %p86
    %p88 = scmp.ne.s32.totalorder %s76, %s77
    %p89 = scmp.eq.s32.totalorder %s25, 1
    %p90 = por %p88, %p89
    %p92 = scmp.ne.s32.totalorder %s77, %s91
    %p93 = scmp.eq.s32.totalorder %s25, 0
    %p94 = por %p92, %p93
    %s96 = sadd.s32 %s95, 1
    %p99 = scmp.eq.s32.totalorder %s19, 1
    %p100 = scmp.ne.s32.totalorder %s95, %s97
    %p101 = scmp.eq.s32.totalorder %s19, 0
    %p102 = por %p100, %p101
    %p103 = scmp.ne.s32.totalorder %s95, %s97
    %p104 = scmp.eq.s32.totalorder %s24, 1
    %p105 = por %p103, %p104
    %p106 = scmp.ne.s32.totalorder %s97, %s98
    %p107 = scmp.eq.s32.totalorder %s24, 0
    %p108 = por %p106, %p107
    %p109 = scmp.ne.s32.totalorder %s97, %s98
    %p110 = scmp.eq.s32.totalorder %s25, 1
    %p111 = por %p109, %p110
    %p113 = scmp.ne.s32.totalorder %s98, %s112
    %p114 = scmp.eq.s32.totalorder %s25, 0
    %p115 = por %p113, %p114
    %s117 = sadd.s32 %s116, 1
    %p120 = scmp.eq.s32.totalorder %s19, 1
    %p121 = scmp.ne.s32.totalorder %s116, %s118
    %p122 = scmp.eq.s32.totalorder %s19, 0
    %p123 = por %p121, %p122
    %p124 = scmp.ne.s32.totalorder %s116, %s118
    %p125 = scmp.eq.s32.totalorder %s24, 1
    %p126 = por %p124, %p125
    %p127 = scmp.ne.s32.totalorder %s118, %s119
    %p128 = scmp.eq.s32.totalorder %s24, 0
    %p129 = por %p127, %p128
    %p130 = scmp.ne.s32.totalorder %s118, %s119
    %p131 = scmp.eq.s32.totalorder %s25, 1
    %p132 = por %p130, %p131
    %p134 = scmp.ne.s32.totalorder %s119, %s133
    %p135 = scmp.eq.s32.totalorder %s25, 0
    %p136 = por %p134, %p135
    %s138 = sadd.s32 %s137, 1
    %p141 = scmp.eq.s32.totalorder %s19, 1
    %p142 = scmp.ne.s32.totalorder %s137, %s139
    %p143 = scmp.eq.s32.totalorder %s19, 0
    %p144 = por %p142, %p143
    %p145 = scmp.ne.s32.totalorder %s137, %s139
    %p146 = scmp.eq.s32.totalorder %s24, 1
    %p147 = por %p145, %p146
    %p148 = scmp.ne.s32.totalorder %s139, %s140
    %p149 = scmp.eq.s32.totalorder %s24, 0
    %p150 = por %p148, %p149
    %p151 = scmp.ne.s32.totalorder %s139, %s140
    %p152 = scmp.eq.s32.totalorder %s25, 1
    %p153 = por %p151, %p152
    %p155 = scmp.ne.s32.totalorder %s140, %s154
    %p156 = scmp.eq.s32.totalorder %s25, 0
    %p157 = por %p155, %p156
    %s159 = sadd.s32 %s158, 1
    %p162 = scmp.eq.s32.totalorder %s19, 1
    %p163 = scmp.ne.s32.totalorder %s158, %s160
    %p164 = scmp.eq.s32.totalorder %s19, 0
    %p165 = por %p163, %p164
    %p166 = scmp.ne.s32.totalorder %s158, %s160
    %p167 = scmp.eq.s32.totalorder %s24, 1
    %p168 = por %p166, %p167
    %p169 = scmp.ne.s32.totalorder %s160, %s161
    %p170 = scmp.eq.s32.totalorder %s24, 0
    %p171 = por %p169, %p170
    %p172 = scmp.ne.s32.totalorder %s160, %s161
    %p173 = scmp.eq.s32.totalorder %s25, 1
    %p174 = por %p172, %p173
    %p176 = scmp.ne.s32.totalorder %s161, %s175
    %p177 = scmp.eq.s32.totalorder %s25, 0
    %p178 = por %p176, %p177
    %s180 = sadd.s32 %s179, 1
    %p183 = scmp.eq.s32.totalorder %s19, 1
    %p184 = scmp.ne.s32.totalorder %s179, %s181
    %p185 = scmp.eq.s32.totalorder %s19, 0
    %p186 = por %p184, %p185
    %p187 = scmp.ne.s32.totalorder %s179, %s181
    %p188 = scmp.eq.s32.totalorder %s24, 1
    %p189 = por %p187, %p188
    %p190 = scmp.ne.s32.totalorder %s181, %s182
    %p191 = scmp.eq.s32.totalorder %s24, 0
    %p192 = por %p190, %p191
    %p193 = scmp.ne.s32.totalorder %s181, %s182
    %p194 = scmp.eq.s32.totalorder %s25, 1
    %p195 = por %p193, %p194
    %p197 = scmp.ne.s32.totalorder %s182, %s196
    %p198 = scmp.eq.s32.totalorder %s25, 0
    %p199 = por %p197, %p198
    %s201 = sadd.s32 %s200, 1
    %p204 = scmp.eq.s32.totalorder %s19, 1
    %p205 = scmp.ne.s32.totalorder %s200, %s202
    %p206 = scmp.eq.s32.totalorder %s19, 0
    %p207 = por %p205, %p206
    %p208 = scmp.ne.s32.totalorder %s200, %s202
    %p209 = scmp.eq.s32.totalorder %s24, 1
    %p210 = por %p208, %p209
    %p211 = scmp.ne.s32.totalorder %s202, %s203
    %p212 = scmp.eq.s32.totalorder %s24, 0
    %p213 = por %p211, %p212
    %p214 = scmp.ne.s32.totalorder %s202, %s203
    %p215 = scmp.eq.s32.totalorder %s25, 1
    %p216 = por %p214, %p215
    %p218 = scmp.ne.s32.totalorder %s203, %s217
    %p219 = scmp.eq.s32.totalorder %s25, 0
    %p220 = por %p218, %p219
    %s222 = sadd.s32 %s221, 1
    %p225 = scmp.eq.s32.totalorder %s19, 1
    %p226 = scmp.ne.s32.totalorder %s221, %s223
    %p227 = scmp.eq.s32.totalorder %s19, 0
    %p228 = por %p226, %p227
    %p229 = scmp.ne.s32.totalorder %s221, %s223
    %p230 = scmp.eq.s32.totalorder %s24, 1
    %p231 = por %p229, %p230
    %p232 = scmp.ne.s32.totalorder %s223, %s224
    %p233 = scmp.eq.s32.totalorder %s24, 0
    %p234 = por %p232, %p233
    %p235 = scmp.ne.s32.totalorder %s223, %s224
    %p236 = scmp.eq.s32.totalorder %s25, 1
    %p237 = por %p235, %p236
    %p239 = scmp.ne.s32.totalorder %s224, %s238
    %p240 = scmp.eq.s32.totalorder %s25, 0
    %p241 = por %p239, %p240
    %s243 = sadd.s32 %s242, 1
    %p246 = scmp.eq.s32.totalorder %s19, 1
    %p247 = scmp.ne.s32.totalorder %s242, %s244
    %p248 = scmp.eq.s32.totalorder %s19, 0
    %p249 = por %p247, %p248
    %p250 = scmp.ne.s32.totalorder %s242, %s244
    %p251 = scmp.eq.s32.totalorder %s24, 1
    %p252 = por %p250, %p251
    %p253 = scmp.ne.s32.totalorder %s244, %s245
    %p254 = scmp.eq.s32.totalorder %s24, 0
    %p255 = por %p253, %p254
    %p256 = scmp.ne.s32.totalorder %s244, %s245
    %p257 = scmp.eq.s32.totalorder %s25, 1
    %p258 = por %p256, %p257
    %p260 = scmp.ne.s32.totalorder %s245, %s259
    %p261 = scmp.eq.s32.totalorder %s25, 0
    %p262 = por %p260, %p261
    %s264 = sadd.s32 %s263, 1
    %p267 = scmp.eq.s32.totalorder %s19, 1
    %p268 = scmp.ne.s32.totalorder %s263, %s265
    %p269 = scmp.eq.s32.totalorder %s19, 0
    %p270 = por %p268, %p269
    %p271 = scmp.ne.s32.totalorder %s263, %s265
    %p272 = scmp.eq.s32.totalorder %s24, 1
    %p273 = por %p271, %p272
    %p274 = scmp.ne.s32.totalorder %s265, %s266
    %p275 = scmp.eq.s32.totalorder %s24, 0
    %p276 = por %p274, %p275
    %p277 = scmp.ne.s32.totalorder %s265, %s266
    %p278 = scmp.eq.s32.totalorder %s25, 1
    %p279 = por %p277, %p278
    %p281 = scmp.ne.s32.totalorder %s266, %s280
    %p282 = scmp.eq.s32.totalorder %s25, 0
    %p283 = por %p281, %p282
    %s285 = sadd.s32 %s284, 1
    %p288 = scmp.eq.s32.totalorder %s19, 1
    %p289 = scmp.ne.s32.totalorder %s284, %s286
    %p290 = scmp.eq.s32.totalorder %s19, 0
    %p291 = por %p289, %p290
    %p292 = scmp.ne.s32.totalorder %s284, %s286
    %p293 = scmp.eq.s32.totalorder %s24, 1
    %p294 = por %p292, %p293
    %p295 = scmp.ne.s32.totalorder %s286, %s287
    %p296 = scmp.eq.s32.totalorder %s24, 0
    %p297 = por %p295, %p296
    %p298 = scmp.ne.s32.totalorder %s286, %s287
    %p299 = scmp.eq.s32.totalorder %s25, 1
    %p300 = por %p298, %p299
    %p302 = scmp.ne.s32.totalorder %s287, %s301
    %p303 = scmp.eq.s32.totalorder %s25, 0
    %p304 = por %p302, %p303
    %s305 = ssub.s32 %s19, %s26
    %p306 = scmp.eq.s32.totalorder %s305, 0
    %s308 = sadd.s32 %s307, 1
    %s309 = scalar_select %p306, %s307, %s308
    %p312 = pneg %p306
    %p313 = scmp.eq.s32.totalorder %s19, 1
    %p314 = por %p312, %p313
    %p315 = scmp.ne.s32.totalorder %s307, %s310
    %p316 = scmp.eq.s32.totalorder %s19, 0
    %p317 = por %p315, %p316
    %p318 = scmp.ne.s32.totalorder %s307, %s310
    %p319 = scmp.eq.s32.totalorder %s24, 1
    %p320 = por %p318, %p319
    %p321 = scmp.ne.s32.totalorder %s310, %s311
    %p322 = scmp.eq.s32.totalorder %s24, 0
    %p323 = por %p321, %p322
    %p324 = scmp.ne.s32.totalorder %s310, %s311
    %p325 = scmp.eq.s32.totalorder %s25, 1
    %p326 = por %p324, %p325
    %p328 = scmp.ne.s32.totalorder %s311, %s327
    %p329 = scmp.eq.s32.totalorder %s25, 0
    %p330 = por %p328, %p329
    %p331 = scmp.le.s32.totalorder 1, %s19
    %p332 = scmp.lt.s32.totalorder %s19, 3
    %p333 = pnand %p331, %p332
    %p334 = pneg %p333
    // Predicated region
    $region9: #{simple_segmentation_forward.1} parent=5 // pred_check
      _
    $region10: #{simple_segmentation_forward.1} parent=5 // pred_check_branch
      %336 = sbr.rel (%p333) target = $region12
    $region11: #{simple_segmentation_forward.1} parent=5 // pred_region
      %s337 = ssub.s32 %s19, 1
      // Predicated region
      $region13: #{simple_segmentation_forward.1} parent=11 // pred_check
        %p338 = pneg %p66
      $region14: #{simple_segmentation_forward.1} parent=11 // pred_check_branch
        %340 = sbr.rel (%p338) target = $region16
      $region15: #{simple_segmentation_forward.1} parent=11 // pred_region
        _
      $region16: #{simple_segmentation_forward.1} parent=11 // pred_fallthru
        _
      // Predicated region
      $region17: #{simple_segmentation_forward.1} parent=11 // pred_check
        %p341 = pneg %p87
      $region18: #{simple_segmentation_forward.1} parent=11 // pred_check_branch
        %343 = sbr.rel (%p341) target = $region20
      $region19: #{simple_segmentation_forward.1} parent=11 // pred_region
        _
      $region20: #{simple_segmentation_forward.1} parent=11 // pred_fallthru
        _
      // Predicated region
      $region21: #{simple_segmentation_forward.1} parent=11 // pred_check
        %p344 = pneg %p108
      $region22: #{simple_segmentation_forward.1} parent=11 // pred_check_branch
        %346 = sbr.rel (%p344) target = $region24
      $region23: #{simple_segmentation_forward.1} parent=11 // pred_region
        _
      $region24: #{simple_segmentation_forward.1} parent=11 // pred_fallthru
        _
      // Predicated region
      $region25: #{simple_segmentation_forward.1} parent=11 // pred_check
        %p347 = pneg %p129
      $region26: #{simple_segmentation_forward.1} parent=11 // pred_check_branch
        %349 = sbr.rel (%p347) target = $region28
      $region27: #{simple_segmentation_forward.1} parent=11 // pred_region
        _
      $region28: #{simple_segmentation_forward.1} parent=11 // pred_fallthru
        _
      // Predicated region
      $region29: #{simple_segmentation_forward.1} parent=11 // pred_check
        %p350 = pneg %p150
      $region30: #{simple_segmentation_forward.1} parent=11 // pred_check_branch
        %352 = sbr.rel (%p350) target = $region32
      $region31: #{simple_segmentation_forward.1} parent=11 // pred_region
        _
      $region32: #{simple_segmentation_forward.1} parent=11 // pred_fallthru
        _
      // Predicated region
      $region33: #{simple_segmentation_forward.1} parent=11 // pred_check
        %p353 = pneg %p171
      $region34: #{simple_segmentation_forward.1} parent=11 // pred_check_branch
        %355 = sbr.rel (%p353) target = $region36
      $region35: #{simple_segmentation_forward.1} parent=11 // pred_region
        _
      $region36: #{simple_segmentation_forward.1} parent=11 // pred_fallthru
        _
      // Predicated region
      $region37: #{simple_segmentation_forward.1} parent=11 // pred_check
        %p356 = pneg %p192
      $region38: #{simple_segmentation_forward.1} parent=11 // pred_check_branch
        %358 = sbr.rel (%p356) target = $region40
      $region39: #{simple_segmentation_forward.1} parent=11 // pred_region
        _
      $region40: #{simple_segmentation_forward.1} parent=11 // pred_fallthru
        _
      // Predicated region
      $region41: #{simple_segmentation_forward.1} parent=11 // pred_check
        %p359 = pneg %p213
      $region42: #{simple_segmentation_forward.1} parent=11 // pred_check_branch
        %361 = sbr.rel (%p359) target = $region44
      $region43: #{simple_segmentation_forward.1} parent=11 // pred_region
        _
      $region44: #{simple_segmentation_forward.1} parent=11 // pred_fallthru
        _
      // Predicated region
      $region45: #{simple_segmentation_forward.1} parent=11 // pred_check
        %p362 = pneg %p234
      $region46: #{simple_segmentation_forward.1} parent=11 // pred_check_branch
        %364 = sbr.rel (%p362) target = $region48
      $region47: #{simple_segmentation_forward.1} parent=11 // pred_region
        _
      $region48: #{simple_segmentation_forward.1} parent=11 // pred_fallthru
        _
      // Predicated region
      $region49: #{simple_segmentation_forward.1} parent=11 // pred_check
        %p365 = pneg %p255
      $region50: #{simple_segmentation_forward.1} parent=11 // pred_check_branch
        %367 = sbr.rel (%p365) target = $region52
      $region51: #{simple_segmentation_forward.1} parent=11 // pred_region
        _
      $region52: #{simple_segmentation_forward.1} parent=11 // pred_fallthru
        _
      // Predicated region
      $region53: #{simple_segmentation_forward.1} parent=11 // pred_check
        %p368 = pneg %p276
      $region54: #{simple_segmentation_forward.1} parent=11 // pred_check_branch
        %370 = sbr.rel (%p368) target = $region56
      $region55: #{simple_segmentation_forward.1} parent=11 // pred_region
        _
      $region56: #{simple_segmentation_forward.1} parent=11 // pred_fallthru
        _
      // Predicated region
      $region57: #{simple_segmentation_forward.1} parent=11 // pred_check
        %p371 = pneg %p297
      $region58: #{simple_segmentation_forward.1} parent=11 // pred_check_branch
        %373 = sbr.rel (%p371) target = $region60
      $region59: #{simple_segmentation_forward.1} parent=11 // pred_region
        _
      $region60: #{simple_segmentation_forward.1} parent=11 // pred_fallthru
        _
    $region12: #{simple_segmentation_forward.1} parent=5 // pred_fallthru
      _
    %p374 = scmp.lt.s32.totalorder %s19, 2
    // Predicated region
    $region61: #{simple_segmentation_forward.1} parent=5 // pred_check
      %p375 = pneg %p374
    $region62: #{simple_segmentation_forward.1} parent=5 // pred_check_branch
      %377 = sbr.rel (%p375) target = $region64
    $region63: #{simple_segmentation_forward.1} parent=5 // pred_region
      // Predicated region
      $region65: #{simple_segmentation_forward.1} parent=63 // pred_check
        %p378 = pneg %p39
      $region66: #{simple_segmentation_forward.1} parent=63 // pred_check_branch
        %380 = sbr.rel (%p378) target = $region68
      $region67: #{simple_segmentation_forward.1} parent=63 // pred_region
        %p381 = scmp.lt.s32.totalorder %s19, 1
        %s382 = scalar_select %p381, %s19, 1
        %s383 = smul.addr %s382, 2
        %s384 = smul.addr %s383, 8
        %s385 = scalar_lea.vmem %s0, %s384
      $region68: #{simple_segmentation_forward.1} parent=63 // pred_fallthru
        _
    $region64: #{simple_segmentation_forward.1} parent=5 // pred_fallthru
      _
    %p386 = scmp.le.s32.totalorder 1, %s19
    %p387 = scmp.lt.s32.totalorder %s19, 3
    %p388 = pnand %p386, %p387
    %p389 = pneg %p388
    // Predicated region
    $region69: #{simple_segmentation_forward.1} parent=5 // pred_check
      _
    $region70: #{simple_segmentation_forward.1} parent=5 // pred_check_branch
      %391 = sbr.rel (%p388) target = $region72
    $region71: #{simple_segmentation_forward.1} parent=5 // pred_region
      %s392 = ssub.s32 %s19, 1
      %p393 = scmp.lt.s32.totalorder %s24, 1
      %s394 = scalar_select %p393, %s24, 1
      %s395 = smul.addr %s394, 2
      %s396 = smul.addr %s395, 8
      %s397 = scalar_lea.vmem %s0, %s396
      %p398 = pneg %p45
      %p399 = pneg %p42
      %p400 = pneg %p66
      %p401 = pneg %p63
      %p402 = pneg %p87
      %p403 = pneg %p84
      %p404 = pneg %p108
      %p405 = pneg %p105
      %p406 = pneg %p129
      %p407 = pneg %p126
      %p408 = pneg %p150
      %p409 = pneg %p147
      %p410 = pneg %p171
      %p411 = pneg %p168
      %p412 = pneg %p192
      %p413 = pneg %p189
      %p414 = pneg %p213
      %p415 = pneg %p210
      %p416 = pneg %p234
      %p417 = pneg %p231
      %p418 = pneg %p255
      %p419 = pneg %p252
      %p420 = pneg %p276
      %p421 = pneg %p273
      %p422 = pneg %p297
      %p423 = pneg %p294
      %p424 = pneg %p323
      %p425 = pneg %p320
      %p426 = scmp.lt.s32.totalorder %s24, 1
      %s427 = scalar_select %p426, %s24, 1
      %s428 = smul.addr %s427, 2
      %s429 = smul.addr %s428, 8
      %s430 = scalar_lea.vmem %s13, %s429
      %p431 = scmp.lt.s32.totalorder %s24, 1
      %s432 = scalar_select %p431, %s24, 1
      %s433 = smul.addr %s432, 2
      %s434 = smul.addr %s433, 8
      %s435 = scalar_lea.vmem %s0, %s434
      %p436 = scmp.lt.s32.totalorder %s24, 1
      %s437 = scalar_select %p436, %s24, 1
      %s438 = smul.addr %s437, 2
      %s439 = smul.addr %s438, 8
      %s440 = scalar_lea.vmem %s13, %s439
      %v441 = vld [vmem:[%s435] sm:$0xff]
      %v442 = vld [vmem:[%s435 + $0x8] sm:$0xff]
      %v443 = vld [vmem:[%s9] sm:$0xff]
      %v444 = vld [vmem:[%s9 + $0x8] sm:$0xff]
      %v445 = vld [vmem:[%s9 + $0x10] sm:$0x1]
      %v446 = vld [vmem:[%s9 + $0x18] sm:$0x1]
      %v447 = vld [vmem:[%s10] sm:$0xff]
      %v448 = vld [vmem:[%s10 + $0x8] sm:$0x1]
      %451 = vrot.lane.b32.xlu0 %v441, 17
      %v452 = vpop.permute.xlu0 %451
      %453 = vrot.lane.b32.xlu0 %v442, 17
      %v454 = vpop.permute.xlu0 %453
      %vm455 = vcmask 138240
      %v456 = vsel %vm455, %v452, %v454
      %v460 = vsel %vm455, 0.0, %v452
      %v461 = vsel %vm455, %v454, 0.0
      %v462 = vlaneseq
      %v463 = vshrl.u32 %v462, 7
      %v464 = vsub.s32 0, %v463
      %v465 = vrot.slane %v443, %v464
      %v466 = vlaneseq
      %v467 = vshrl.u32 %v466, 7
      %v468 = vsub.s32 0, %v467
      %v469 = vrot.slane %v444, %v468
      %v470 = vmul.f32 %v460, %v465
      %v471 = vmul.f32 %v456, %v469
      %v472 = vlaneseq
      %v473 = vshrl.u32 %v472, 7
      %v474 = vsub.s32 1, %v473
      %v475 = vrot.slane %v443, %v474
      %v476 = vlaneseq
      %v477 = vshrl.u32 %v476, 7
      %v478 = vsub.s32 1, %v477
      %v479 = vrot.slane %v444, %v478
      %482 = vrot.lane.b32.xlu0 %v475, 1
      %v483 = vpop.permute.xlu0 %482
      %484 = vrot.lane.b32.xlu0 %v479, 1
      %v485 = vpop.permute.xlu0 %484
      %vm486 = vcmask 7168
      %v487 = vsel %vm486, %v483, %v485
      %v491 = vmul.f32 %v460, %v483
      %v492 = vmul.f32 %v456, %v487
      %v493 = vmul.f32 %v461, %v485
      %v494 = vlaneseq
      %v495 = vshrl.u32 %v494, 7
      %v496 = vsub.s32 2, %v495
      %v497 = vrot.slane %v443, %v496
      %v498 = vlaneseq
      %v499 = vshrl.u32 %v498, 7
      %v500 = vsub.s32 2, %v499
      %v501 = vrot.slane %v444, %v500
      %504 = vrot.lane.b32.xlu0 %v497, 2
      %v505 = vpop.permute.xlu0 %504
      %506 = vrot.lane.b32.xlu0 %v501, 2
      %v507 = vpop.permute.xlu0 %506
      %vm508 = vcmask 15360
      %v509 = vsel %vm508, %v505, %v507
      %v513 = vmul.f32 %v460, %v505
      %v514 = vmul.f32 %v456, %v509
      %v515 = vmul.f32 %v461, %v507
      %v516 = vlaneseq
      %v517 = vshrl.u32 %v516, 7
      %v518 = vsub.s32 3, %v517
      %v519 = vrot.slane %v443, %v518
      %v520 = vlaneseq
      %v521 = vshrl.u32 %v520, 7
      %v522 = vsub.s32 3, %v521
      %v523 = vrot.slane %v444, %v522
      %526 = vrot.lane.b32.xlu0 %v519, 16
      %v527 = vpop.permute.xlu0 %526
      %528 = vrot.lane.b32.xlu0 %v523, 16
      %v529 = vpop.permute.xlu0 %528
      %vm530 = vcmask 130048
      %v531 = vsel %vm530, %v527, %v529
      %v535 = vmul.f32 %v460, %v527
      %v536 = vmul.f32 %v456, %v531
      %v537 = vmul.f32 %v461, %v529
      %v538 = vlaneseq
      %v539 = vshrl.u32 %v538, 7
      %v540 = vsub.s32 5, %v539
      %v541 = vrot.slane %v443, %v540
      %v542 = vlaneseq
      %v543 = vshrl.u32 %v542, 7
      %v544 = vsub.s32 5, %v543
      %v545 = vrot.slane %v444, %v544
      %548 = vrot.lane.b32.xlu0 %v541, 18
      %v549 = vpop.permute.xlu0 %548
      %550 = vrot.lane.b32.xlu0 %v545, 18
      %v551 = vpop.permute.xlu0 %550
      %vm552 = vcmask 146432
      %v553 = vsel %vm552, %v549, %v551
      %v557 = vmul.f32 %v460, %v549
      %v558 = vmul.f32 %v456, %v553
      %v559 = vmul.f32 %v461, %v551
      %v560 = vlaneseq
      %v561 = vshrl.u32 %v560, 7
      %v562 = vsub.s32 6, %v561
      %v563 = vrot.slane %v443, %v562
      %v564 = vlaneseq
      %v565 = vshrl.u32 %v564, 7
      %v566 = vsub.s32 6, %v565
      %v567 = vrot.slane %v444, %v566
      %570 = vrot.lane.b32.xlu0 %v563, 32
      %v571 = vpop.permute.xlu0 %570
      %572 = vrot.lane.b32.xlu0 %v567, 32
      %v573 = vpop.permute.xlu0 %572
      %vm574 = vcmask 261120
      %v575 = vsel %vm574, %v571, %v573
      %v579 = vmul.f32 %v460, %v571
      %v580 = vmul.f32 %v456, %v575
      %v581 = vmul.f32 %v461, %v573
      %v582 = vlaneseq
      %v583 = vshrl.u32 %v582, 7
      %v584 = vsub.s32 7, %v583
      %v585 = vrot.slane %v443, %v584
      %v586 = vlaneseq
      %v587 = vshrl.u32 %v586, 7
      %v588 = vsub.s32 7, %v587
      %v589 = vrot.slane %v444, %v588
      %592 = vrot.lane.b32.xlu0 %v585, 33
      %v593 = vpop.permute.xlu0 %592
      %594 = vrot.lane.b32.xlu0 %v589, 33
      %v595 = vpop.permute.xlu0 %594
      %vm596 = vcmask 269312
      %v597 = vsel %vm596, %v593, %v595
      %v601 = vmul.f32 %v460, %v593
      %v602 = vmul.f32 %v456, %v597
      %v603 = vmul.f32 %v461, %v595
      %v604 = vlaneseq
      %v605 = vshrl.u32 %v604, 7
      %v606 = vsub.s32 0, %v605
      %v607 = vrot.slane %v445, %v606
      %v608 = vlaneseq
      %v609 = vshrl.u32 %v608, 7
      %v610 = vsub.s32 0, %v609
      %v611 = vrot.slane %v446, %v610
      %614 = vrot.lane.b32.xlu0 %v607, 34
      %v615 = vpop.permute.xlu0 %614
      %616 = vrot.lane.b32.xlu0 %v611, 34
      %v617 = vpop.permute.xlu0 %616
      %vm618 = vcmask 277504
      %v619 = vsel %vm618, %v615, %v617
      %v623 = vmul.f32 %v460, %v615
      %v624 = vmul.f32 %v456, %v619
      %v625 = vmul.f32 %v461, %v617
      %629 = vrot.lane.b32.xlu0 %v491, 127
      %v630 = vpop.permute.xlu0 %629
      %631 = vrot.lane.b32.xlu0 %v492, 127
      %v632 = vpop.permute.xlu0 %631
      %633 = vrot.lane.b32.xlu0 %v493, 127
      %v634 = vpop.permute.xlu0 %633
      %vm635 = vcmask 1039360
      %v636 = vsel %vm635, %v630, %v632
      %v637 = vsel %vm635, %v632, %v634
      %643 = vrot.lane.b32.xlu0 %v513, 126
      %v644 = vpop.permute.xlu0 %643
      %645 = vrot.lane.b32.xlu0 %v514, 126
      %v646 = vpop.permute.xlu0 %645
      %647 = vrot.lane.b32.xlu0 %v515, 126
      %v648 = vpop.permute.xlu0 %647
      %vm649 = vcmask 1031168
      %v650 = vsel %vm649, %v644, %v646
      %v651 = vsel %vm649, %v646, %v648
      %657 = vrot.lane.b32.xlu0 %v535, 112
      %v658 = vpop.permute.xlu0 %657
      %659 = vrot.lane.b32.xlu0 %v536, 112
      %v660 = vpop.permute.xlu0 %659
      %661 = vrot.lane.b32.xlu0 %v537, 112
      %v662 = vpop.permute.xlu0 %661
      %vm663 = vcmask 916480
      %v664 = vsel %vm663, %v658, %v660
      %v665 = vsel %vm663, %v660, %v662
      %670 = vrot.lane.b32.xlu0 %v460, 111
      %v671 = vpop.permute.xlu0 %670
      %672 = vrot.lane.b32.xlu0 %v456, 111
      %v673 = vpop.permute.xlu0 %672
      %674 = vrot.lane.b32.xlu0 %v461, 111
      %v675 = vpop.permute.xlu0 %674
      %vm676 = vcmask 908288
      %v677 = vsel %vm676, %v671, %v673
      %v678 = vsel %vm676, %v673, %v675
      %684 = vrot.lane.b32.xlu0 %v557, 110
      %v685 = vpop.permute.xlu0 %684
      %686 = vrot.lane.b32.xlu0 %v558, 110
      %v687 = vpop.permute.xlu0 %686
      %688 = vrot.lane.b32.xlu0 %v559, 110
      %v689 = vpop.permute.xlu0 %688
      %vm690 = vcmask 900096
      %v691 = vsel %vm690, %v685, %v687
      %v692 = vsel %vm690, %v687, %v689
      %698 = vrot.lane.b32.xlu0 %v579, 96
      %v699 = vpop.permute.xlu0 %698
      %700 = vrot.lane.b32.xlu0 %v580, 96
      %v701 = vpop.permute.xlu0 %700
      %702 = vrot.lane.b32.xlu0 %v581, 96
      %v703 = vpop.permute.xlu0 %702
      %vm704 = vcmask 785408
      %v705 = vsel %vm704, %v699, %v701
      %v706 = vsel %vm704, %v701, %v703
      %712 = vrot.lane.b32.xlu0 %v601, 95
      %v713 = vpop.permute.xlu0 %712
      %714 = vrot.lane.b32.xlu0 %v602, 95
      %v715 = vpop.permute.xlu0 %714
      %716 = vrot.lane.b32.xlu0 %v603, 95
      %v717 = vpop.permute.xlu0 %716
      %vm718 = vcmask 777216
      %v719 = vsel %vm718, %v713, %v715
      %v720 = vsel %vm718, %v715, %v717
      %726 = vrot.lane.b32.xlu0 %v623, 94
      %v727 = vpop.permute.xlu0 %726
      %728 = vrot.lane.b32.xlu0 %v624, 94
      %v729 = vpop.permute.xlu0 %728
      %730 = vrot.lane.b32.xlu0 %v625, 94
      %v731 = vpop.permute.xlu0 %730
      %vm732 = vcmask 769024
      %v733 = vsel %vm732, %v727, %v729
      %v734 = vsel %vm732, %v729, %v731
      %v737 = vld [vmem:[%s1] sm:$0xff]
      %v738 = vld [vmem:[%s1 + $0x8] sm:$0xff]
      %v739 = vld [vmem:[%s2] sm:$0xff]
      %v740 = vld [vmem:[%s2 + $0x8] sm:$0xff]
      %742 = vset.pattern.permute.xlu0 0
      %743 = vperm.xlu0 %742, %v739
      %v744 = vpop.permute.xlu0 %743
      %747 = vset.pattern.permute.xlu0 0
      %748 = vperm.xlu0 %747, %v740
      %v749 = vpop.permute.xlu0 %748
      %vm751 = vcmask 588800
      %v753 = vsel %vm751, %v737, 0
      %v756 = vsel %vm751, %v738, 0
      %758 = vmatprep.subr.mxu0 0.0
      %759 = vmatpush1.msra.mxu0 0.0
      %760 = vmatprep.subr.mxu0 0.0
      %761 = vmatpush1.msra.mxu0 0.0
      %762 = vmatprep.subr.mxu0 0.0
      %763 = vmatpush1.msra.mxu0 0.0
      %764 = vmatprep.subr.mxu0 0.0
      %765 = vmatpush1.msra.mxu0 0.0
      %766 = vmatprep.subr.mxu0 0.0
      %767 = vmatpush1.msra.mxu0 0.0
      %768 = vmatprep.subr.mxu0 0.0
      %769 = vmatpush1.msra.mxu0 0.0
      %770 = vmatprep.subr.mxu0 0.0
      %771 = vmatpush1.msra.mxu0 0.0
      %772 = vmatprep.subr.mxu0 %v734
      %773 = vmatpush1.msra.mxu0 %v733
      %774 = vmatprep.subr.mxu0 %v720
      %775 = vmatpush1.msra.mxu0 %v719
      %776 = vmatprep.subr.mxu0 %v706
      %777 = vmatpush1.msra.mxu0 %v705
      %778 = vmatprep.subr.mxu0 %v692
      %779 = vmatpush1.msra.mxu0 %v691
      %780 = vmatprep.subr.mxu0 %v678
      %781 = vmatpush1.msra.mxu0 %v677
      %782 = vmatprep.subr.mxu0 %v665
      %783 = vmatpush1.msra.mxu0 %v664
      %784 = vmatprep.subr.mxu0 %v651
      %785 = vmatpush1.msra.mxu0 %v650
      %786 = vmatprep.subr.mxu0 %v637
      %787 = vmatpush1.msra.mxu0 %v636
      %788 = vmatprep.subr.mxu0 %v471
      %789 = vmatpush1.msra.mxu0 %v470
      %790 = vmatprep.subr.mxu0 0.0
      %791 = vmatpush2.msra.mxu0 0.0
      %792 = vmatprep.subr.mxu0 0.0
      %793 = vmatpush2.msra.mxu0 0.0
      %794 = vmatprep.subr.mxu0 0.0
      %795 = vmatpush2.msra.mxu0 0.0
      %796 = vmatprep.subr.mxu0 0.0
      %797 = vmatpush2.msra.mxu0 0.0
      %798 = vmatprep.subr.mxu0 0.0
      %799 = vmatpush2.msra.mxu0 0.0
      %800 = vmatprep.subr.mxu0 0.0
      %801 = vmatpush2.msra.mxu0 0.0
      %802 = vmatprep.subr.mxu0 0.0
      %803 = vmatpush2.msra.mxu0 0.0
      %804 = vmatprep.subr.mxu0 0.0
      %805 = vmatpush2.msra.mxu0 0.0
      %806 = vmatprep.subr.mxu0 0.0
      %807 = vmatpush2.msra.mxu0 0.0
      %808 = vmatprep.subr.mxu0 0.0
      %809 = vmatpush2.msra.mxu0 0.0
      %810 = vmatprep.subr.mxu0 0.0
      %811 = vmatpush2.msra.mxu0 0.0
      %812 = vmatprep.subr.mxu0 0.0
      %813 = vmatpush2.msra.mxu0 0.0
      %814 = vmatprep.subr.mxu0 0.0
      %815 = vmatpush2.msra.mxu0 0.0
      %816 = vmatprep.subr.mxu0 0.0
      %817 = vmatpush2.msra.mxu0 0.0
      %818 = vmatprep.subr.mxu0 0.0
      %819 = vmatpush2.msra.mxu0 0.0
      %820 = vmatprep.subr.mxu0 0.0
      %821 = vmatpush2.msra.mxu0 0.0
      %822 = vmatprep.mubr.f32.mxu0 0.0
      %823 = vmatmul.mubr.f32.gmra.mxu0 %v753
      %v824 = vpop.f32.mrf.mxu0
      %v825 = vadd.f32 %v744, %v824
      %v826 = vpop.f32.mrf.mxu0
      %v827 = vadd.f32 %v744, %v826
      %828 = vmatprep.mubr.f32.mxu0 0.0
      %829 = vmatmul.mubr.f32.gmra.mxu0 %v756
      %v830 = vpop.f32.mrf.mxu0
      %v831 = vadd.f32 %v749, %v830
      %v832 = vpop.f32.mrf.mxu0
      %v833 = vadd.f32 %v749, %v832
      %834 = vdwg.mxu0
      %v835 = vld [vmem:[%s11] sm:$0xff]
      %v836 = vld [vmem:[%s11 + $0x8] sm:$0xff]
      %v837 = vld [vmem:[%s11 + $0x10] sm:$0xff]
      %v838 = vld [vmem:[%s11 + $0x18] sm:$0xff]
      %v839 = vld [vmem:[%s11 + $0x20] sm:$0xff]
      %v840 = vld [vmem:[%s11 + $0x28] sm:$0xff]
      %v841 = vld [vmem:[%s11 + $0x30] sm:$0xff]
      %v842 = vld [vmem:[%s11 + $0x38] sm:$0xff]
      %v843 = vld [vmem:[%s11 + $0x40] sm:$0xff]
      %v844 = vld [vmem:[%s11 + $0x48] sm:$0xff]
      %v845 = vld [vmem:[%s11 + $0x50] sm:$0xff]
      %v846 = vld [vmem:[%s11 + $0x58] sm:$0xff]
      %v847 = vld [vmem:[%s11 + $0x60] sm:$0xff]
      %v848 = vld [vmem:[%s11 + $0x68] sm:$0xff]
      %v849 = vld [vmem:[%s11 + $0x70] sm:$0xff]
      %v850 = vld [vmem:[%s11 + $0x78] sm:$0xff]
      %v851 = vld [vmem:[%s11 + $0x80] sm:$0xff]
      %v852 = vld [vmem:[%s11 + $0x88] sm:$0xff]
      %v853 = vld [vmem:[%s11 + $0x90] sm:$0xff]
      %v854 = vld [vmem:[%s11 + $0x98] sm:$0xff]
      %v855 = vld [vmem:[%s11 + $0xa0] sm:$0xff]
      %v856 = vld [vmem:[%s11 + $0xa8] sm:$0xff]
      %v857 = vld [vmem:[%s11 + $0xb0] sm:$0xff]
      %v858 = vld [vmem:[%s11 + $0xb8] sm:$0xff]
      %v859 = vld [vmem:[%s11 + $0xc0] sm:$0xff]
      %v860 = vld [vmem:[%s11 + $0xc8] sm:$0xff]
      %v861 = vld [vmem:[%s11 + $0xd0] sm:$0xff]
      %v862 = vld [vmem:[%s11 + $0xd8] sm:$0xff]
      %v863 = vld [vmem:[%s11 + $0xe0] sm:$0xff]
      %v864 = vld [vmem:[%s11 + $0xe8] sm:$0xff]
      %v865 = vld [vmem:[%s11 + $0xf0] sm:$0xff]
      %v866 = vld [vmem:[%s11 + $0xf8] sm:$0xff]
      %867 = vmatprep.subr.mxu0 0.0
      %868 = vmatpush1.msra.mxu0 %v850
      %869 = vmatprep.subr.mxu0 0.0
      %870 = vmatpush1.msra.mxu0 %v849
      %871 = vmatprep.subr.mxu0 0.0
      %872 = vmatpush1.msra.mxu0 %v848
      %873 = vmatprep.subr.mxu0 0.0
      %874 = vmatpush1.msra.mxu0 %v847
      %875 = vmatprep.subr.mxu0 0.0
      %876 = vmatpush1.msra.mxu0 %v846
      %877 = vmatprep.subr.mxu0 0.0
      %878 = vmatpush1.msra.mxu0 %v845
      %879 = vmatprep.subr.mxu0 0.0
      %880 = vmatpush1.msra.mxu0 %v844
      %881 = vmatprep.subr.mxu0 0.0
      %882 = vmatpush1.msra.mxu0 %v843
      %883 = vmatprep.subr.mxu0 0.0
      %884 = vmatpush1.msra.mxu0 %v842
      %885 = vmatprep.subr.mxu0 0.0
      %886 = vmatpush1.msra.mxu0 %v841
      %887 = vmatprep.subr.mxu0 0.0
      %888 = vmatpush1.msra.mxu0 %v840
      %889 = vmatprep.subr.mxu0 0.0
      %890 = vmatpush1.msra.mxu0 %v839
      %891 = vmatprep.subr.mxu0 0.0
      %892 = vmatpush1.msra.mxu0 %v838
      %893 = vmatprep.subr.mxu0 0.0
      %894 = vmatpush1.msra.mxu0 %v837
      %895 = vmatprep.subr.mxu0 0.0
      %896 = vmatpush1.msra.mxu0 %v836
      %897 = vmatprep.subr.mxu0 0.0
      %898 = vmatpush1.msra.mxu0 %v835
      %899 = vmatprep.subr.mxu0 0.0
      %900 = vmatpush2.msra.mxu0 %v866
      %901 = vmatprep.subr.mxu0 0.0
      %902 = vmatpush2.msra.mxu0 %v865
      %903 = vmatprep.subr.mxu0 0.0
      %904 = vmatpush2.msra.mxu0 %v864
      %905 = vmatprep.subr.mxu0 0.0
      %906 = vmatpush2.msra.mxu0 %v863
      %907 = vmatprep.subr.mxu0 0.0
      %908 = vmatpush2.msra.mxu0 %v862
      %909 = vmatprep.subr.mxu0 0.0
      %910 = vmatpush2.msra.mxu0 %v861
      %911 = vmatprep.subr.mxu0 0.0
      %912 = vmatpush2.msra.mxu0 %v860
      %913 = vmatprep.subr.mxu0 0.0
      %914 = vmatpush2.msra.mxu0 %v859
      %915 = vmatprep.subr.mxu0 0.0
      %916 = vmatpush2.msra.mxu0 %v858
      %917 = vmatprep.subr.mxu0 0.0
      %918 = vmatpush2.msra.mxu0 %v857
      %919 = vmatprep.subr.mxu0 0.0
      %920 = vmatpush2.msra.mxu0 %v856
      %921 = vmatprep.subr.mxu0 0.0
      %922 = vmatpush2.msra.mxu0 %v855
      %923 = vmatprep.subr.mxu0 0.0
      %924 = vmatpush2.msra.mxu0 %v854
      %925 = vmatprep.subr.mxu0 0.0
      %926 = vmatpush2.msra.mxu0 %v853
      %927 = vmatprep.subr.mxu0 0.0
      %928 = vmatpush2.msra.mxu0 %v852
      %929 = vmatprep.subr.mxu0 0.0
      %930 = vmatpush2.msra.mxu0 %v851
      %931 = vmatprep.mubr.f32.mxu0 %v827
      %932 = vmatmul.mubr.f32.gmra.mxu0 %v825
      %v933 = vpop.f32.mrf.mxu0
      %v934 = vadd.f32 0.0, %v933
      %v935 = vpop.f32.mrf.mxu0
      %936 = vmatprep.mubr.f32.mxu0 %v833
      %937 = vmatmul.mubr.f32.gmra.mxu0 %v831
      %v938 = vpop.f32.mrf.mxu0
      %v939 = vadd.f32 0.0, %v938
      %v940 = vpop.f32.mrf.mxu0
      %941 = vdwg.mxu0
      %v942 = vmax.f32 %v934, 0.0
      %v943 = vmax.f32 %v939, 0.0
      %946 = vrot.lane.b32.xlu0 %v942, 9
      %v947 = vpop.permute.xlu0 %946
      %948 = vrot.lane.b32.xlu0 %v943, 9
      %v949 = vpop.permute.xlu0 %948
      %vm952 = vcmask 72704
      %v953 = vsel %vm952, 0.0, %v947
      %v954 = vsel %vm952, 0.0, %v949
      %vm955 = vcmask 596992
      %v956 = vsel %vm955, %v953, 0.0
      %v957 = vsel %vm955, %v954, 0.0
      %v958 = vlaneseq
      %v959 = vshrl.u32 %v958, 7
      %v960 = vsub.s32 0, %v959
      %v961 = vrot.slane %v447, %v960
      %v962 = vmul.f32 %v956, %v961
      %v963 = vmul.f32 %v957, %v961
      %v964 = vlaneseq
      %v965 = vshrl.u32 %v964, 7
      %v966 = vsub.s32 1, %v965
      %v967 = vrot.slane %v447, %v966
      %969 = vrot.lane.b32.xlu0 %v967, 1
      %v970 = vpop.permute.xlu0 %969
      %v972 = vmul.f32 %v956, %v970
      %v973 = vmul.f32 %v957, %v970
      %v974 = vlaneseq
      %v975 = vshrl.u32 %v974, 7
      %v976 = vsub.s32 2, %v975
      %v977 = vrot.slane %v447, %v976
      %979 = vrot.lane.b32.xlu0 %v977, 2
      %v980 = vpop.permute.xlu0 %979
      %v982 = vmul.f32 %v956, %v980
      %v983 = vmul.f32 %v957, %v980
      %v984 = vlaneseq
      %v985 = vshrl.u32 %v984, 7
      %v986 = vsub.s32 3, %v985
      %v987 = vrot.slane %v447, %v986
      %989 = vrot.lane.b32.xlu0 %v987, 8
      %v990 = vpop.permute.xlu0 %989
      %v992 = vmul.f32 %v956, %v990
      %v993 = vmul.f32 %v957, %v990
      %v994 = vlaneseq
      %v995 = vshrl.u32 %v994, 7
      %v996 = vsub.s32 5, %v995
      %v997 = vrot.slane %v447, %v996
      %999 = vrot.lane.b32.xlu0 %v997, 10
      %v1000 = vpop.permute.xlu0 %999
      %v1002 = vmul.f32 %v956, %v1000
      %v1003 = vmul.f32 %v957, %v1000
      %v1004 = vlaneseq
      %v1005 = vshrl.u32 %v1004, 7
      %v1006 = vsub.s32 6, %v1005
      %v1007 = vrot.slane %v447, %v1006
      %1009 = vrot.lane.b32.xlu0 %v1007, 16
      %v1010 = vpop.permute.xlu0 %1009
      %v1012 = vmul.f32 %v956, %v1010
      %v1013 = vmul.f32 %v957, %v1010
      %v1014 = vlaneseq
      %v1015 = vshrl.u32 %v1014, 7
      %v1016 = vsub.s32 7, %v1015
      %v1017 = vrot.slane %v447, %v1016
      %1019 = vrot.lane.b32.xlu0 %v1017, 17
      %v1020 = vpop.permute.xlu0 %1019
      %v1022 = vmul.f32 %v956, %v1020
      %v1023 = vmul.f32 %v957, %v1020
      %v1024 = vlaneseq
      %v1025 = vshrl.u32 %v1024, 7
      %v1026 = vsub.s32 0, %v1025
      %v1027 = vrot.slane %v448, %v1026
      %1029 = vrot.lane.b32.xlu0 %v1027, 18
      %v1030 = vpop.permute.xlu0 %1029
      %v1032 = vmul.f32 %v956, %v1030
      %v1033 = vmul.f32 %v957, %v1030
      %1036 = vrot.lane.b32.xlu0 %v972, 127
      %v1037 = vpop.permute.xlu0 %1036
      %1038 = vrot.lane.b32.xlu0 %v973, 127
      %v1039 = vpop.permute.xlu0 %1038
      %1044 = vrot.lane.b32.xlu0 %v982, 126
      %v1045 = vpop.permute.xlu0 %1044
      %1046 = vrot.lane.b32.xlu0 %v983, 126
      %v1047 = vpop.permute.xlu0 %1046
      %1052 = vrot.lane.b32.xlu0 %v992, 120
      %v1053 = vpop.permute.xlu0 %1052
      %1054 = vrot.lane.b32.xlu0 %v993, 120
      %v1055 = vpop.permute.xlu0 %1054
      %1060 = vrot.lane.b32.xlu0 %v956, 119
      %v1061 = vpop.permute.xlu0 %1060
      %1062 = vrot.lane.b32.xlu0 %v957, 119
      %v1063 = vpop.permute.xlu0 %1062
      %1068 = vrot.lane.b32.xlu0 %v1002, 118
      %v1069 = vpop.permute.xlu0 %1068
      %1070 = vrot.lane.b32.xlu0 %v1003, 118
      %v1071 = vpop.permute.xlu0 %1070
      %1076 = vrot.lane.b32.xlu0 %v1012, 112
      %v1077 = vpop.permute.xlu0 %1076
      %1078 = vrot.lane.b32.xlu0 %v1013, 112
      %v1079 = vpop.permute.xlu0 %1078
      %1084 = vrot.lane.b32.xlu0 %v1022, 111
      %v1085 = vpop.permute.xlu0 %1084
      %1086 = vrot.lane.b32.xlu0 %v1023, 111
      %v1087 = vpop.permute.xlu0 %1086
      %1092 = vrot.lane.b32.xlu0 %v1032, 110
      %v1093 = vpop.permute.xlu0 %1092
      %1094 = vrot.lane.b32.xlu0 %v1033, 110
      %v1095 = vpop.permute.xlu0 %1094
      %v1098 = vld [vmem:[%s3] sm:$0xff]
      %v1099 = vld [vmem:[%s3 + $0x8] sm:$0xff]
      %v1100 = vld [vmem:[%s3 + $0x10] sm:$0xff]
      %v1101 = vld [vmem:[%s3 + $0x18] sm:$0xff]
      %v1102 = vld [vmem:[%s3 + $0x20] sm:$0xff]
      %v1103 = vld [vmem:[%s3 + $0x28] sm:$0xff]
      %v1104 = vld [vmem:[%s3 + $0x30] sm:$0xff]
      %v1105 = vld [vmem:[%s3 + $0x38] sm:$0xff]
      %v1106 = vld [vmem:[%s4] sm:$0xff]
      %v1107 = vld [vmem:[%s4 + $0x8] sm:$0xff]
      %v1108 = vld [vmem:[%s4 + $0x10] sm:$0xff]
      %v1109 = vld [vmem:[%s4 + $0x18] sm:$0xff]
      %1111 = vset.pattern.permute.xlu0 0
      %1112 = vperm.xlu0 %1111, %v1106
      %v1113 = vpop.permute.xlu0 %1112
      %1116 = vset.pattern.permute.xlu0 0
      %1117 = vperm.xlu0 %1116, %v1107
      %v1118 = vpop.permute.xlu0 %1117
      %1121 = vset.pattern.permute.xlu0 0
      %1122 = vperm.xlu0 %1121, %v1108
      %v1123 = vpop.permute.xlu0 %1122
      %1126 = vset.pattern.permute.xlu0 0
      %1127 = vperm.xlu0 %1126, %v1109
      %v1128 = vpop.permute.xlu0 %1127
      %v1131 = vsel %vm530, %v1099, 0
      %v1134 = vsel %vm530, %v1101, 0
      %v1137 = vsel %vm530, %v1103, 0
      %v1140 = vsel %vm530, %v1105, 0
      %1142 = vmatprep.subr.mxu0 0.0
      %1143 = vmatpush1.msra.mxu0 %v1087
      %1144 = vmatprep.subr.mxu0 0.0
      %1145 = vmatpush1.msra.mxu0 %v1085
      %1146 = vmatprep.subr.mxu0 0.0
      %1147 = vmatpush1.msra.mxu0 %v1079
      %1148 = vmatprep.subr.mxu0 0.0
      %1149 = vmatpush1.msra.mxu0 %v1077
      %1150 = vmatprep.subr.mxu0 0.0
      %1151 = vmatpush1.msra.mxu0 %v1071
      %1152 = vmatprep.subr.mxu0 0.0
      %1153 = vmatpush1.msra.mxu0 %v1069
      %1154 = vmatprep.subr.mxu0 0.0
      %1155 = vmatpush1.msra.mxu0 %v1063
      %1156 = vmatprep.subr.mxu0 0.0
      %1157 = vmatpush1.msra.mxu0 %v1061
      %1158 = vmatprep.subr.mxu0 0.0
      %1159 = vmatpush1.msra.mxu0 %v1055
      %1160 = vmatprep.subr.mxu0 0.0
      %1161 = vmatpush1.msra.mxu0 %v1053
      %1162 = vmatprep.subr.mxu0 0.0
      %1163 = vmatpush1.msra.mxu0 %v1047
      %1164 = vmatprep.subr.mxu0 0.0
      %1165 = vmatpush1.msra.mxu0 %v1045
      %1166 = vmatprep.subr.mxu0 0.0
      %1167 = vmatpush1.msra.mxu0 %v1039
      %1168 = vmatprep.subr.mxu0 0.0
      %1169 = vmatpush1.msra.mxu0 %v1037
      %1170 = vmatprep.subr.mxu0 0.0
      %1171 = vmatpush1.msra.mxu0 %v963
      %1172 = vmatprep.subr.mxu0 0.0
      %1173 = vmatpush1.msra.mxu0 %v962
      %1174 = vmatprep.subr.mxu0 0.0
      %1175 = vmatpush2.msra.mxu0 0.0
      %1176 = vmatprep.subr.mxu0 0.0
      %1177 = vmatpush2.msra.mxu0 0.0
      %1178 = vmatprep.subr.mxu0 0.0
      %1179 = vmatpush2.msra.mxu0 0.0
      %1180 = vmatprep.subr.mxu0 0.0
      %1181 = vmatpush2.msra.mxu0 0.0
      %1182 = vmatprep.subr.mxu0 0.0
      %1183 = vmatpush2.msra.mxu0 0.0
      %1184 = vmatprep.subr.mxu0 0.0
      %1185 = vmatpush2.msra.mxu0 0.0
      %1186 = vmatprep.subr.mxu0 0.0
      %1187 = vmatpush2.msra.mxu0 0.0
      %1188 = vmatprep.subr.mxu0 0.0
      %1189 = vmatpush2.msra.mxu0 0.0
      %1190 = vmatprep.subr.mxu0 0.0
      %1191 = vmatpush2.msra.mxu0 0.0
      %1192 = vmatprep.subr.mxu0 0.0
      %1193 = vmatpush2.msra.mxu0 0.0
      %1194 = vmatprep.subr.mxu0 0.0
      %1195 = vmatpush2.msra.mxu0 0.0
      %1196 = vmatprep.subr.mxu0 0.0
      %1197 = vmatpush2.msra.mxu0 0.0
      %1198 = vmatprep.subr.mxu0 0.0
      %1199 = vmatpush2.msra.mxu0 0.0
      %1200 = vmatprep.subr.mxu0 0.0
      %1201 = vmatpush2.msra.mxu0 0.0
      %1202 = vmatprep.subr.mxu0 0.0
      %1203 = vmatpush2.msra.mxu0 %v1095
      %1204 = vmatprep.subr.mxu0 0.0
      %1205 = vmatpush2.msra.mxu0 %v1093
      %1206 = vmatprep.mubr.f32.mxu0 %v1131
      %1207 = vmatmul.mubr.f32.gmra.mxu0 %v1098
      %v1208 = vpop.f32.mrf.mxu0
      %v1209 = vadd.f32 %v1113, %v1208
      %v1210 = vpop.f32.mrf.mxu0
      %1211 = vmatprep.mubr.f32.mxu0 %v1134
      %1212 = vmatmul.mubr.f32.gmra.mxu0 %v1100
      %v1213 = vpop.f32.mrf.mxu0
      %v1214 = vadd.f32 %v1118, %v1213
      %v1215 = vpop.f32.mrf.mxu0
      %1216 = vmatprep.mubr.f32.mxu0 %v1137
      %1217 = vmatmul.mubr.f32.gmra.mxu0 %v1102
      %v1218 = vpop.f32.mrf.mxu0
      %v1219 = vadd.f32 %v1123, %v1218
      %v1220 = vpop.f32.mrf.mxu0
      %1221 = vmatprep.mubr.f32.mxu0 %v1140
      %1222 = vmatmul.mubr.f32.gmra.mxu0 %v1104
      %v1223 = vpop.f32.mrf.mxu0
      %v1224 = vadd.f32 %v1128, %v1223
      %v1225 = vpop.f32.mrf.mxu0
      %1226 = vdwg.mxu0
      %v1227 = vmax.f32 %v1209, 0.0
      %v1228 = vmax.f32 %v1214, 0.0
      %v1229 = vmax.f32 %v1219, 0.0
      %v1230 = vmax.f32 %v1224, 0.0
      %1235 = vrot.lane.b32.xlu0 %v1227, 9
      %v1236 = vpop.permute.xlu0 %1235
      %1237 = vrot.lane.b32.xlu0 %v1228, 9
      %v1238 = vpop.permute.xlu0 %1237
      %1239 = vrot.lane.b32.xlu0 %v1229, 9
      %v1240 = vpop.permute.xlu0 %1239
      %1241 = vrot.lane.b32.xlu0 %v1230, 9
      %v1242 = vpop.permute.xlu0 %1241
      %v1247 = vsel %vm952, 0.0, %v1236
      %v1248 = vsel %vm952, 0.0, %v1238
      %v1249 = vsel %vm952, 0.0, %v1240
      %v1250 = vsel %vm952, 0.0, %v1242
      %v1251 = vsel %vm955, %v1247, 0.0
      %v1252 = vsel %vm955, %v1248, 0.0
      %v1253 = vsel %vm955, %v1249, 0.0
      %v1254 = vsel %vm955, %v1250, 0.0
      %v1255 = vmul.f32 %v1251, %v961
      %v1256 = vmul.f32 %v1252, %v961
      %v1257 = vmul.f32 %v1253, %v961
      %v1258 = vmul.f32 %v1254, %v961
      %v1259 = vmul.f32 %v1251, %v970
      %v1260 = vmul.f32 %v1252, %v970
      %v1261 = vmul.f32 %v1253, %v970
      %v1262 = vmul.f32 %v1254, %v970
      %v1263 = vmul.f32 %v1251, %v980
      %v1264 = vmul.f32 %v1252, %v980
      %v1265 = vmul.f32 %v1253, %v980
      %v1266 = vmul.f32 %v1254, %v980
      %v1267 = vmul.f32 %v1251, %v990
      %v1268 = vmul.f32 %v1252, %v990
      %v1269 = vmul.f32 %v1253, %v990
      %v1270 = vmul.f32 %v1254, %v990
      %v1271 = vmul.f32 %v1251, %v1000
      %v1272 = vmul.f32 %v1252, %v1000
      %v1273 = vmul.f32 %v1253, %v1000
      %v1274 = vmul.f32 %v1254, %v1000
      %v1275 = vmul.f32 %v1251, %v1010
      %v1276 = vmul.f32 %v1252, %v1010
      %v1277 = vmul.f32 %v1253, %v1010
      %v1278 = vmul.f32 %v1254, %v1010
      %v1279 = vmul.f32 %v1251, %v1020
      %v1280 = vmul.f32 %v1252, %v1020
      %v1281 = vmul.f32 %v1253, %v1020
      %v1282 = vmul.f32 %v1254, %v1020
      %v1283 = vmul.f32 %v1251, %v1030
      %v1284 = vmul.f32 %v1252, %v1030
      %v1285 = vmul.f32 %v1253, %v1030
      %v1286 = vmul.f32 %v1254, %v1030
      %1291 = vrot.lane.b32.xlu0 %v1259, 127
      %v1292 = vpop.permute.xlu0 %1291
      %1293 = vrot.lane.b32.xlu0 %v1260, 127
      %v1294 = vpop.permute.xlu0 %1293
      %1295 = vrot.lane.b32.xlu0 %v1261, 127
      %v1296 = vpop.permute.xlu0 %1295
      %1297 = vrot.lane.b32.xlu0 %v1262, 127
      %v1298 = vpop.permute.xlu0 %1297
      %1307 = vrot.lane.b32.xlu0 %v1263, 126
      %v1308 = vpop.permute.xlu0 %1307
      %1309 = vrot.lane.b32.xlu0 %v1264, 126
      %v1310 = vpop.permute.xlu0 %1309
      %1311 = vrot.lane.b32.xlu0 %v1265, 126
      %v1312 = vpop.permute.xlu0 %1311
      %1313 = vrot.lane.b32.xlu0 %v1266, 126
      %v1314 = vpop.permute.xlu0 %1313
      %1323 = vrot.lane.b32.xlu0 %v1267, 120
      %v1324 = vpop.permute.xlu0 %1323
      %1325 = vrot.lane.b32.xlu0 %v1268, 120
      %v1326 = vpop.permute.xlu0 %1325
      %1327 = vrot.lane.b32.xlu0 %v1269, 120
      %v1328 = vpop.permute.xlu0 %1327
      %1329 = vrot.lane.b32.xlu0 %v1270, 120
      %v1330 = vpop.permute.xlu0 %1329
      %1339 = vrot.lane.b32.xlu0 %v1251, 119
      %v1340 = vpop.permute.xlu0 %1339
      %1341 = vrot.lane.b32.xlu0 %v1252, 119
      %v1342 = vpop.permute.xlu0 %1341
      %1343 = vrot.lane.b32.xlu0 %v1253, 119
      %v1344 = vpop.permute.xlu0 %1343
      %1345 = vrot.lane.b32.xlu0 %v1254, 119
      %v1346 = vpop.permute.xlu0 %1345
      %1355 = vrot.lane.b32.xlu0 %v1271, 118
      %v1356 = vpop.permute.xlu0 %1355
      %1357 = vrot.lane.b32.xlu0 %v1272, 118
      %v1358 = vpop.permute.xlu0 %1357
      %1359 = vrot.lane.b32.xlu0 %v1273, 118
      %v1360 = vpop.permute.xlu0 %1359
      %1361 = vrot.lane.b32.xlu0 %v1274, 118
      %v1362 = vpop.permute.xlu0 %1361
      %1371 = vrot.lane.b32.xlu0 %v1275, 112
      %v1372 = vpop.permute.xlu0 %1371
      %1373 = vrot.lane.b32.xlu0 %v1276, 112
      %v1374 = vpop.permute.xlu0 %1373
      %1375 = vrot.lane.b32.xlu0 %v1277, 112
      %v1376 = vpop.permute.xlu0 %1375
      %1377 = vrot.lane.b32.xlu0 %v1278, 112
      %v1378 = vpop.permute.xlu0 %1377
      %1387 = vrot.lane.b32.xlu0 %v1279, 111
      %v1388 = vpop.permute.xlu0 %1387
      %1389 = vrot.lane.b32.xlu0 %v1280, 111
      %v1390 = vpop.permute.xlu0 %1389
      %1391 = vrot.lane.b32.xlu0 %v1281, 111
      %v1392 = vpop.permute.xlu0 %1391
      %1393 = vrot.lane.b32.xlu0 %v1282, 111
      %v1394 = vpop.permute.xlu0 %1393
      %1403 = vrot.lane.b32.xlu0 %v1283, 110
      %v1404 = vpop.permute.xlu0 %1403
      %1405 = vrot.lane.b32.xlu0 %v1284, 110
      %v1406 = vpop.permute.xlu0 %1405
      %1407 = vrot.lane.b32.xlu0 %v1285, 110
      %v1408 = vpop.permute.xlu0 %1407
      %1409 = vrot.lane.b32.xlu0 %v1286, 110
      %v1410 = vpop.permute.xlu0 %1409
      %v1415 = vld [vmem:[%s5] sm:$0xff]
      %v1416 = vld [vmem:[%s5 + $0x8] sm:$0xff]
      %v1417 = vld [vmem:[%s5 + $0x10] sm:$0xff]
      %v1418 = vld [vmem:[%s5 + $0x18] sm:$0xff]
      %v1419 = vld [vmem:[%s5 + $0x20] sm:$0xff]
      %v1420 = vld [vmem:[%s5 + $0x28] sm:$0xff]
      %v1421 = vld [vmem:[%s6] sm:$0xff]
      %v1422 = vld [vmem:[%s6 + $0x8] sm:$0xff]
      %1424 = vset.pattern.permute.xlu0 0
      %1425 = vperm.xlu0 %1424, %v1421
      %v1426 = vpop.permute.xlu0 %1425
      %1429 = vset.pattern.permute.xlu0 0
      %1430 = vperm.xlu0 %1429, %v1422
      %v1431 = vpop.permute.xlu0 %1430
      %v1434 = vsel %vm574, %v1417, 0
      %v1437 = vsel %vm574, %v1420, 0
      %1439 = vmatprep.subr.mxu0 0.0
      %1440 = vmatpush1.msra.mxu0 %v1330
      %1441 = vmatprep.subr.mxu0 0.0
      %1442 = vmatpush1.msra.mxu0 %v1328
      %1443 = vmatprep.subr.mxu0 0.0
      %1444 = vmatpush1.msra.mxu0 %v1326
      %1445 = vmatprep.subr.mxu0 0.0
      %1446 = vmatpush1.msra.mxu0 %v1324
      %1447 = vmatprep.subr.mxu0 0.0
      %1448 = vmatpush1.msra.mxu0 %v1314
      %1449 = vmatprep.subr.mxu0 0.0
      %1450 = vmatpush1.msra.mxu0 %v1312
      %1451 = vmatprep.subr.mxu0 0.0
      %1452 = vmatpush1.msra.mxu0 %v1310
      %1453 = vmatprep.subr.mxu0 0.0
      %1454 = vmatpush1.msra.mxu0 %v1308
      %1455 = vmatprep.subr.mxu0 0.0
      %1456 = vmatpush1.msra.mxu0 %v1298
      %1457 = vmatprep.subr.mxu0 0.0
      %1458 = vmatpush1.msra.mxu0 %v1296
      %1459 = vmatprep.subr.mxu0 0.0
      %1460 = vmatpush1.msra.mxu0 %v1294
      %1461 = vmatprep.subr.mxu0 0.0
      %1462 = vmatpush1.msra.mxu0 %v1292
      %1463 = vmatprep.subr.mxu0 0.0
      %1464 = vmatpush1.msra.mxu0 %v1258
      %1465 = vmatprep.subr.mxu0 0.0
      %1466 = vmatpush1.msra.mxu0 %v1257
      %1467 = vmatprep.subr.mxu0 0.0
      %1468 = vmatpush1.msra.mxu0 %v1256
      %1469 = vmatprep.subr.mxu0 0.0
      %1470 = vmatpush1.msra.mxu0 %v1255
      %1471 = vmatprep.subr.mxu0 0.0
      %1472 = vmatpush2.msra.mxu0 %v1394
      %1473 = vmatprep.subr.mxu0 0.0
      %1474 = vmatpush2.msra.mxu0 %v1392
      %1475 = vmatprep.subr.mxu0 0.0
      %1476 = vmatpush2.msra.mxu0 %v1390
      %1477 = vmatprep.subr.mxu0 0.0
      %1478 = vmatpush2.msra.mxu0 %v1388
      %1479 = vmatprep.subr.mxu0 0.0
      %1480 = vmatpush2.msra.mxu0 %v1378
      %1481 = vmatprep.subr.mxu0 0.0
      %1482 = vmatpush2.msra.mxu0 %v1376
      %1483 = vmatprep.subr.mxu0 0.0
      %1484 = vmatpush2.msra.mxu0 %v1374
      %1485 = vmatprep.subr.mxu0 0.0
      %1486 = vmatpush2.msra.mxu0 %v1372
      %1487 = vmatprep.subr.mxu0 0.0
      %1488 = vmatpush2.msra.mxu0 %v1362
      %1489 = vmatprep.subr.mxu0 0.0
      %1490 = vmatpush2.msra.mxu0 %v1360
      %1491 = vmatprep.subr.mxu0 0.0
      %1492 = vmatpush2.msra.mxu0 %v1358
      %1493 = vmatprep.subr.mxu0 0.0
      %1494 = vmatpush2.msra.mxu0 %v1356
      %1495 = vmatprep.subr.mxu0 0.0
      %1496 = vmatpush2.msra.mxu0 %v1346
      %1497 = vmatprep.subr.mxu0 0.0
      %1498 = vmatpush2.msra.mxu0 %v1344
      %1499 = vmatprep.subr.mxu0 0.0
      %1500 = vmatpush2.msra.mxu0 %v1342
      %1501 = vmatprep.subr.mxu0 0.0
      %1502 = vmatpush2.msra.mxu0 %v1340
      %1503 = vmatprep.mubr.f32.mxu0 %v1416
      %1504 = vmatmul.mubr.f32.gmra.mxu0 %v1415
      %v1505 = vpop.f32.mrf.mxu0
      %v1506 = vadd.f32 %v1426, %v1505
      %v1507 = vpop.f32.mrf.mxu0
      %1508 = vmatprep.mubr.f32.mxu0 %v1419
      %1509 = vmatmul.mubr.f32.gmra.mxu0 %v1418
      %v1510 = vpop.f32.mrf.mxu0
      %v1511 = vadd.f32 %v1431, %v1510
      %v1512 = vpop.f32.mrf.mxu0
      %1513 = vdwg.mxu0
      %1514 = vmatprep.subr.mxu0 0.0
      %1515 = vmatpush1.msra.mxu0 0.0
      %1516 = vmatprep.subr.mxu0 0.0
      %1517 = vmatpush1.msra.mxu0 0.0
      %1518 = vmatprep.subr.mxu0 0.0
      %1519 = vmatpush1.msra.mxu0 0.0
      %1520 = vmatprep.subr.mxu0 0.0
      %1521 = vmatpush1.msra.mxu0 0.0
      %1522 = vmatprep.subr.mxu0 0.0
      %1523 = vmatpush1.msra.mxu0 0.0
      %1524 = vmatprep.subr.mxu0 0.0
      %1525 = vmatpush1.msra.mxu0 0.0
      %1526 = vmatprep.subr.mxu0 0.0
      %1527 = vmatpush1.msra.mxu0 0.0
      %1528 = vmatprep.subr.mxu0 0.0
      %1529 = vmatpush1.msra.mxu0 0.0
      %1530 = vmatprep.subr.mxu0 0.0
      %1531 = vmatpush1.msra.mxu0 0.0
      %1532 = vmatprep.subr.mxu0 0.0
      %1533 = vmatpush1.msra.mxu0 0.0
      %1534 = vmatprep.subr.mxu0 0.0
      %1535 = vmatpush1.msra.mxu0 0.0
      %1536 = vmatprep.subr.mxu0 0.0
      %1537 = vmatpush1.msra.mxu0 0.0
      %1538 = vmatprep.subr.mxu0 0.0
      %1539 = vmatpush1.msra.mxu0 %v1410
      %1540 = vmatprep.subr.mxu0 0.0
      %1541 = vmatpush1.msra.mxu0 %v1408
      %1542 = vmatprep.subr.mxu0 0.0
      %1543 = vmatpush1.msra.mxu0 %v1406
      %1544 = vmatprep.subr.mxu0 0.0
      %1545 = vmatpush1.msra.mxu0 %v1404
      %1546 = vmatprep.subr.mxu0 0.0
      %1547 = vmatpush2.msra.mxu0 0.0
      %1548 = vmatprep.subr.mxu0 0.0
      %1549 = vmatpush2.msra.mxu0 0.0
      %1550 = vmatprep.subr.mxu0 0.0
      %1551 = vmatpush2.msra.mxu0 0.0
      %1552 = vmatprep.subr.mxu0 0.0
      %1553 = vmatpush2.msra.mxu0 0.0
      %1554 = vmatprep.subr.mxu0 0.0
      %1555 = vmatpush2.msra.mxu0 0.0
      %1556 = vmatprep.subr.mxu0 0.0
      %1557 = vmatpush2.msra.mxu0 0.0
      %1558 = vmatprep.subr.mxu0 0.0
      %1559 = vmatpush2.msra.mxu0 0.0
      %1560 = vmatprep.subr.mxu0 0.0
      %1561 = vmatpush2.msra.mxu0 0.0
      %1562 = vmatprep.subr.mxu0 0.0
      %1563 = vmatpush2.msra.mxu0 0.0
      %1564 = vmatprep.subr.mxu0 0.0
      %1565 = vmatpush2.msra.mxu0 0.0
      %1566 = vmatprep.subr.mxu0 0.0
      %1567 = vmatpush2.msra.mxu0 0.0
      %1568 = vmatprep.subr.mxu0 0.0
      %1569 = vmatpush2.msra.mxu0 0.0
      %1570 = vmatprep.subr.mxu0 0.0
      %1571 = vmatpush2.msra.mxu0 0.0
      %1572 = vmatprep.subr.mxu0 0.0
      %1573 = vmatpush2.msra.mxu0 0.0
      %1574 = vmatprep.subr.mxu0 0.0
      %1575 = vmatpush2.msra.mxu0 0.0
      %1576 = vmatprep.subr.mxu0 0.0
      %1577 = vmatpush2.msra.mxu0 0.0
      %1578 = vmatprep.mubr.f32.mxu0 0.0
      %1579 = vmatmul.mubr.f32.gmra.mxu0 %v1434
      %v1580 = vpop.f32.mrf.mxu0
      %v1581 = vadd.f32 %v1506, %v1580
      %v1582 = vpop.f32.mrf.mxu0
      %1583 = vmatprep.mubr.f32.mxu0 0.0
      %1584 = vmatmul.mubr.f32.gmra.mxu0 %v1437
      %v1585 = vpop.f32.mrf.mxu0
      %v1586 = vadd.f32 %v1511, %v1585
      %v1587 = vpop.f32.mrf.mxu0
      %1588 = vdwg.mxu0
      %v1589 = vmax.f32 %v1581, 0.0
      %v1590 = vmax.f32 %v1586, 0.0
      %v1591 = vld [vmem:[%s7] sm:$0x1f]
      %v1592 = vld [vmem:[%s8] sm:$0x1f]
      %1594 = vset.pattern.permute.xlu0 0
      %1595 = vperm.xlu0 %1594, %v1592
      %v1596 = vpop.permute.xlu0 %1595
      %v1599 = vsel %vm530, %v1591, 0
      %1601 = vmatprep.subr.mxu0 0.0
      %1602 = vmatpush1.msra.mxu0 0.0
      %1603 = vmatprep.subr.mxu0 0.0
      %1604 = vmatpush1.msra.mxu0 0.0
      %1605 = vmatprep.subr.mxu0 0.0
      %1606 = vmatpush1.msra.mxu0 0.0
      %1607 = vmatprep.subr.mxu0 0.0
      %1608 = vmatpush1.msra.mxu0 0.0
      %1609 = vmatprep.subr.mxu0 0.0
      %1610 = vmatpush1.msra.mxu0 0.0
      %1611 = vmatprep.subr.mxu0 0.0
      %1612 = vmatpush1.msra.mxu0 0.0
      %1613 = vmatprep.subr.mxu0 0.0
      %1614 = vmatpush1.msra.mxu0 0.0
      %1615 = vmatprep.subr.mxu0 0.0
      %1616 = vmatpush1.msra.mxu0 0.0
      %1617 = vmatprep.subr.mxu0 0.0
      %1618 = vmatpush1.msra.mxu0 0.0
      %1619 = vmatprep.subr.mxu0 0.0
      %1620 = vmatpush1.msra.mxu0 0.0
      %1621 = vmatprep.subr.mxu0 0.0
      %1622 = vmatpush1.msra.mxu0 0.0
      %1623 = vmatprep.subr.mxu0 0.0
      %1624 = vmatpush1.msra.mxu0 0.0
      %1625 = vmatprep.subr.mxu0 0.0
      %1626 = vmatpush1.msra.mxu0 0.0
      %1627 = vmatprep.subr.mxu0 0.0
      %1628 = vmatpush1.msra.mxu0 0.0
      %1629 = vmatprep.subr.mxu0 0.0
      %1630 = vmatpush1.msra.mxu0 %v1590
      %1631 = vmatprep.subr.mxu0 0.0
      %1632 = vmatpush1.msra.mxu0 %v1589
      %1633 = vmatprep.subr.mxu0 0.0
      %1634 = vmatpush2.msra.mxu0 0.0
      %1635 = vmatprep.subr.mxu0 0.0
      %1636 = vmatpush2.msra.mxu0 0.0
      %1637 = vmatprep.subr.mxu0 0.0
      %1638 = vmatpush2.msra.mxu0 0.0
      %1639 = vmatprep.subr.mxu0 0.0
      %1640 = vmatpush2.msra.mxu0 0.0
      %1641 = vmatprep.subr.mxu0 0.0
      %1642 = vmatpush2.msra.mxu0 0.0
      %1643 = vmatprep.subr.mxu0 0.0
      %1644 = vmatpush2.msra.mxu0 0.0
      %1645 = vmatprep.subr.mxu0 0.0
      %1646 = vmatpush2.msra.mxu0 0.0
      %1647 = vmatprep.subr.mxu0 0.0
      %1648 = vmatpush2.msra.mxu0 0.0
      %1649 = vmatprep.subr.mxu0 0.0
      %1650 = vmatpush2.msra.mxu0 0.0
      %1651 = vmatprep.subr.mxu0 0.0
      %1652 = vmatpush2.msra.mxu0 0.0
      %1653 = vmatprep.subr.mxu0 0.0
      %1654 = vmatpush2.msra.mxu0 0.0
      %1655 = vmatprep.subr.mxu0 0.0
      %1656 = vmatpush2.msra.mxu0 0.0
      %1657 = vmatprep.subr.mxu0 0.0
      %1658 = vmatpush2.msra.mxu0 0.0
      %1659 = vmatprep.subr.mxu0 0.0
      %1660 = vmatpush2.msra.mxu0 0.0
      %1661 = vmatprep.subr.mxu0 0.0
      %1662 = vmatpush2.msra.mxu0 0.0
      %1663 = vmatprep.subr.mxu0 0.0
      %1664 = vmatpush2.msra.mxu0 0.0
      %1665 = vmatprep.mubr.f32.mxu0 0.0
      %1666 = vmatmul.mubr.f32.gmra.mxu0 %v1599
      %v1667 = vpop.f32.mrf.mxu0
      %v1668 = vadd.f32 %v1596, %v1667
      %v1669 = vpop.f32.mrf.mxu0
      %1670 = vdwg.mxu0
      %v1671 = vld [vmem:[%s12] sm:$0xff]
      %v1672 = vld [vmem:[%s12 + $0x8] sm:$0xff]
      %v1673 = vld [vmem:[%s12 + $0x10] sm:$0xff]
      %v1674 = vld [vmem:[%s12 + $0x18] sm:$0xff]
      %v1675 = vld [vmem:[%s12 + $0x20] sm:$0xff]
      %v1676 = vld [vmem:[%s12 + $0x28] sm:$0xff]
      %v1677 = vld [vmem:[%s12 + $0x30] sm:$0xff]
      %v1678 = vld [vmem:[%s12 + $0x38] sm:$0xff]
      %v1679 = vld [vmem:[%s12 + $0x40] sm:$0xff]
      %v1680 = vld [vmem:[%s12 + $0x48] sm:$0xff]
      %v1681 = vld [vmem:[%s12 + $0x50] sm:$0xff]
      %v1682 = vld [vmem:[%s12 + $0x58] sm:$0xff]
      %v1683 = vld [vmem:[%s12 + $0x60] sm:$0xff]
      %v1684 = vld [vmem:[%s12 + $0x68] sm:$0xff]
      %v1685 = vld [vmem:[%s12 + $0x70] sm:$0xff]
      %v1686 = vld [vmem:[%s12 + $0x78] sm:$0xff]
      %vm1687 = vcmask 523264
      %v1689 = vsel %vm1687, %v1668, 0
      %1691 = vmatprep.subr.mxu0 0.0
      %1692 = vmatpush1.msra.mxu0 0.0
      %1693 = vmatprep.subr.mxu0 0.0
      %1694 = vmatpush1.msra.mxu0 0.0
      %1695 = vmatprep.subr.mxu0 0.0
      %1696 = vmatpush1.msra.mxu0 0.0
      %1697 = vmatprep.subr.mxu0 0.0
      %1698 = vmatpush1.msra.mxu0 0.0
      %1699 = vmatprep.subr.mxu0 0.0
      %1700 = vmatpush1.msra.mxu0 0.0
      %1701 = vmatprep.subr.mxu0 0.0
      %1702 = vmatpush1.msra.mxu0 0.0
      %1703 = vmatprep.subr.mxu0 0.0
      %1704 = vmatpush1.msra.mxu0 0.0
      %1705 = vmatprep.subr.mxu0 0.0
      %1706 = vmatpush1.msra.mxu0 0.0
      %1707 = vmatprep.subr.mxu0 %v1686
      %1708 = vmatpush1.msra.mxu0 %v1685
      %1709 = vmatprep.subr.mxu0 %v1684
      %1710 = vmatpush1.msra.mxu0 %v1683
      %1711 = vmatprep.subr.mxu0 %v1682
      %1712 = vmatpush1.msra.mxu0 %v1681
      %1713 = vmatprep.subr.mxu0 %v1680
      %1714 = vmatpush1.msra.mxu0 %v1679
      %1715 = vmatprep.subr.mxu0 %v1678
      %1716 = vmatpush1.msra.mxu0 %v1677
      %1717 = vmatprep.subr.mxu0 %v1676
      %1718 = vmatpush1.msra.mxu0 %v1675
      %1719 = vmatprep.subr.mxu0 %v1674
      %1720 = vmatpush1.msra.mxu0 %v1673
      %1721 = vmatprep.subr.mxu0 %v1672
      %1722 = vmatpush1.msra.mxu0 %v1671
      %1723 = vmatprep.subr.mxu0 0.0
      %1724 = vmatpush2.msra.mxu0 0.0
      %1725 = vmatprep.subr.mxu0 0.0
      %1726 = vmatpush2.msra.mxu0 0.0
      %1727 = vmatprep.subr.mxu0 0.0
      %1728 = vmatpush2.msra.mxu0 0.0
      %1729 = vmatprep.subr.mxu0 0.0
      %1730 = vmatpush2.msra.mxu0 0.0
      %1731 = vmatprep.subr.mxu0 0.0
      %1732 = vmatpush2.msra.mxu0 0.0
      %1733 = vmatprep.subr.mxu0 0.0
      %1734 = vmatpush2.msra.mxu0 0.0
      %1735 = vmatprep.subr.mxu0 0.0
      %1736 = vmatpush2.msra.mxu0 0.0
      %1737 = vmatprep.subr.mxu0 0.0
      %1738 = vmatpush2.msra.mxu0 0.0
      %1739 = vmatprep.subr.mxu0 0.0
      %1740 = vmatpush2.msra.mxu0 0.0
      %1741 = vmatprep.subr.mxu0 0.0
      %1742 = vmatpush2.msra.mxu0 0.0
      %1743 = vmatprep.subr.mxu0 0.0
      %1744 = vmatpush2.msra.mxu0 0.0
      %1745 = vmatprep.subr.mxu0 0.0
      %1746 = vmatpush2.msra.mxu0 0.0
      %1747 = vmatprep.subr.mxu0 0.0
      %1748 = vmatpush2.msra.mxu0 0.0
      %1749 = vmatprep.subr.mxu0 0.0
      %1750 = vmatpush2.msra.mxu0 0.0
      %1751 = vmatprep.subr.mxu0 0.0
      %1752 = vmatpush2.msra.mxu0 0.0
      %1753 = vmatprep.subr.mxu0 0.0
      %1754 = vmatpush2.msra.mxu0 0.0
      %1755 = vmatprep.mubr.f32.mxu0 0.0
      %1756 = vmatmul.mubr.f32.gmra.mxu0 %v1689
      %v1757 = vpop.f32.mrf.mxu0
      %v1758 = vadd.f32 0.0, %v1757
      %v1759 = vpop.f32.mrf.mxu0
      %v1760 = vadd.f32 0.0, %v1759
      %1761 = vdwg.mxu0
      %1762 = vst [vmem:[%s440] sm:$0x1f] %v1758
      %1763 = vst [vmem:[%s440 + $0x8] sm:$0x1f] %v1760
      %p1764 = scmp.lt.s32.totalorder %s24, 1
      %s1765 = scalar_select %p1764, %s24, 1
      %s1766 = smul.addr %s1765, 2
      %s1767 = smul.addr %s1766, 8
      %s1768 = scalar_lea.vmem %s13, %s1767
      // Predicated region
      $region73: #{simple_segmentation_forward.1} parent=71 // pred_check
        %p1769 = pneg %p320
      $region74: #{simple_segmentation_forward.1} parent=71 // pred_check_branch
        %1771 = sbr.rel (%p1769) target = $region76
      $region75: #{simple_segmentation_forward.1} parent=71 // pred_region
        _
      $region76: #{simple_segmentation_forward.1} parent=71 // pred_fallthru
        _
    $region72: #{simple_segmentation_forward.1} parent=5 // pred_fallthru
      _
    %p1772 = scmp.le.s32.totalorder 2, %s19
    // Predicated region
    $region77: #{simple_segmentation_forward.1} parent=5 // pred_check
      %p1773 = pneg %p1772
    $region78: #{simple_segmentation_forward.1} parent=5 // pred_check_branch
      %1775 = sbr.rel (%p1773) target = $region80
    $region79: #{simple_segmentation_forward.1} parent=5 // pred_region
      %s1776 = ssub.s32 %s19, 2
      // Predicated region
      $region81: #{simple_segmentation_forward.1} parent=79 // pred_check
        %p1777 = pneg %p326
      $region82: #{simple_segmentation_forward.1} parent=79 // pred_check_branch
        %1779 = sbr.rel (%p1777) target = $region84
      $region83: #{simple_segmentation_forward.1} parent=79 // pred_region
        %p1780 = scmp.lt.s32.totalorder %s25, 1
        %s1781 = scalar_select %p1780, %s25, 1
        %s1782 = smul.addr %s1781, 2
        %s1783 = smul.addr %s1782, 8
        %s1784 = scalar_lea.vmem %s13, %s1783
      $region84: #{simple_segmentation_forward.1} parent=79 // pred_fallthru
        _
    $region80: #{simple_segmentation_forward.1} parent=5 // pred_fallthru
      _
  $region6: #{simple_segmentation_forward.1} parent=0 // loop_footer
    %s23 = sadd.s32 1, %s19
  $region7: #{simple_segmentation_forward.1} parent=0 // loop_footer_branch
    %18 = sbr.rel target = $region3
  $region8: #{simple_segmentation_forward.1} parent=0 // loop_exit
    _

</llo_original>
